<compile_context>
chip_gen: v6e
topology: v6e:2x2x1
jax: 0.10.0
libtpu: 0.0.40
codegen_flags: <defaults>
</compile_context>

<pallas_src>
import functools

import jax
import jax.numpy as jnp
from jax import lax
from jax.experimental import pallas as pl
from jax.experimental.pallas import tpu as pltpu


# Tap-building (im2col rolls + mask multiplies) element type.  float32 is safe
# on every generation (v5e has no native bf16 VALU/XLU); on v6e/v7x flipping
# this to jnp.bfloat16 halves the data volume of the roll/mask phase.  The MXU
# operands are cast to bf16 regardless; the sampler path stays f32.
_TAP_DTYPE = jnp.float32


def _stn_kernel(x_ref, xs_ref, m1_ref, m2_ref, w1_ref, b1_ref, w2_ref, b2_ref,
                w1l_ref, b1fc_ref, w2fc_ref, b2fc_ref, e_ref, et_ref,
                coords_ref, out_ref, theta_ref, *, H, W, C1, CN, CP, TB):
    HW = H * W
    L = TB * HW
    f32 = jnp.float32
    bf16 = jnp.bfloat16

    # ---------------- localization convs (fused im2col matmuls) ------------
    def taps(src, ksz):
        # ksz*ksz lane-rolled copies of src stacked on sublanes; rolls only
        # cross image boundaries at positions the (hoisted) masks zero anyway.
        rad = ksz // 2
        pieces = []
        for ky in range(ksz):
            for kx in range(ksz):
                off = (ky - rad) * W + (kx - rad)
                pieces.append(src if off == 0
                              else pltpu.roll(src, shift=(-off) % L, axis=1))
        return jnp.concatenate(pieces, axis=0)

    x_t = x_ref[...].astype(_TAP_DTYPE)                        # (CP, L)
    st1 = (taps(x_t, 5) * m1_ref[...]).astype(bf16)            # (25*CP, L)
    a1 = jnp.maximum(
        jnp.dot(w1_ref[...], st1, preferred_element_type=f32) + b1_ref[...],
        0.0)                                                   # (C1, L) f32

    st2 = (taps(a1.astype(_TAP_DTYPE), 3) * m2_ref[...]).astype(bf16)
    a2 = jnp.maximum(
        jnp.dot(w2_ref[...], st2, preferred_element_type=f32) + b2_ref[...],
        0.0)                                                   # (CN, L) f32

    # ---------------- fc_loc, batched over the TB chunk (f32) --------------
    # h_pre[o, l] = sum_c a2[c, l] * W_fc1[o, c*HW + (l mod HW)]
    h_pre = a2[0:1, :] * w1l_ref[0:32, :]
    for c in range(1, CN):
        h_pre = h_pre + a2[c:c + 1, :] * w1l_ref[c * 32:(c + 1) * 32, :]

    if TB == 1:
        h_t = jnp.sum(h_pre, axis=1, keepdims=True)            # (32, 1)
    else:
        h_t = jnp.dot(h_pre, e_ref[...], preferred_element_type=f32)  # (32,TB)
    h_t = jnp.maximum(h_t + b1fc_ref[...], 0.0)
    theta_t = (jnp.dot(w2fc_ref[...], h_t, preferred_element_type=f32)
               + b2fc_ref[...])                                # (6, TB)
    theta_ref[...] = theta_t

    # ---------------- affine_grid (align_corners=False) --------------------
    if TB == 1:
        tl = jnp.broadcast_to(theta_t, (6, L))
    else:
        tl = jnp.dot(theta_t, et_ref[...], preferred_element_type=f32)  # (6,L)
    xn = coords_ref[0:1, :]
    yn = coords_ref[1:2, :]
    gx = tl[0:1, :] * xn + tl[1:2, :] * yn + tl[2:3, :]
    gy = tl[3:4, :] * xn + tl[4:5, :] * yn + tl[5:6, :]

    # ---------------- grid_sample (bilinear, zeros, align_corners=False) ---
    ix = (gx + 1.0) * (0.5 * W) - 0.5
    iy = (gy + 1.0) * (0.5 * H) - 0.5
    x0f = jnp.floor(ix)
    y0f = jnp.floor(iy)
    wx = ix - x0f
    wy = iy - y0f
    x0 = x0f.astype(jnp.int32)
    y0 = y0f.astype(jnp.int32)
    x1 = x0 + 1
    y1 = y0 + 1

    def corner_w(xc, yc, wgt):
        ok = (xc >= 0) & (xc < W) & (yc >= 0) & (yc < H)
        return jnp.where(ok, wgt, 0.0)                         # (1, L)

    w00 = corner_w(x0, y0, (1.0 - wx) * (1.0 - wy))
    w10 = corner_w(x1, y0, wx * (1.0 - wy))
    w01 = corner_w(x0, y1, (1.0 - wx) * wy)
    w11 = corner_w(x1, y1, wx * wy)

    # One dense one-hot selector; the other 3 corners are sublane rolls (XLU).
    # idx00 is taken mod HW (per image!), so out-of-range corners (which have
    # zero weight) never alias across images within the chunk.
    idx00 = jnp.mod(y0 * W + x0, HW)                           # (1, L)
    q_idx = lax.broadcasted_iota(jnp.int32, (HW, L), 0)
    sel00 = jnp.where(q_idx == idx00, 1.0, 0.0)                # (HW, L) f32
    wmat = sel00 * w00
    wmat = wmat + pltpu.roll(sel00, shift=1, axis=0) * w10
    wmat = wmat + pltpu.roll(sel00, shift=W, axis=0) * w01
    wmat = wmat + pltpu.roll(sel00, shift=W + 1, axis=0) * w11

    # Single sampler matmul for the whole chunk; per-image results are the
    # CP-aligned diagonal blocks, stored straight into out_ref.
    big = jnp.dot(xs_ref[...], wmat, preferred_element_type=f32)   # (TB*CP, L)
    for t in range(TB):
        out_ref[:, t * HW:(t + 1) * HW] = (
            big[t * CP:(t + 1) * CP, t * HW:(t + 1) * HW].astype(out_ref.dtype))


def _vmem_capacity_bytes():
    try:
        return int(pltpu.get_tpu_info().vmem_capacity_bytes)
    except Exception:
        return 64 << 20                      # conservative (v7x physical VMEM)


def _pick_tb(B, HW, max_lanes=2048):
    """Images per grid step: lane-dense, VMEM-aware (the dense bilinear matrix
    set is ~4 live f32 (HW, TB*HW) slabs), and NB = B/TB >= 2 whenever possible
    so both v7x TensorCores get grid steps and I/O pipelining kicks in."""
    sel_budget = _vmem_capacity_bytes() // 8
    tb = max(1, min(B, max(1, max_lanes // HW)))
    while tb > 1 and 16 * HW * HW * tb > sel_budget:
        tb -= 1
    if B >= 2:
        tb = min(tb, B // 2)
    tb = max(tb, 1)
    while B % tb:
        tb -= 1
    return tb


def init_stn_params(key, imdim, imsize, class_num):
    C1 = 8
    zdim = class_num * imsize * imsize
    k = jax.random.split(key, 6)
    return dict(
        w_conv1=jax.random.normal(k[0], (C1, imdim, 5, 5), jnp.float32) * 0.05,
        b_conv1=jax.random.normal(k[1], (C1,), jnp.float32) * 0.05,
        w_conv2=jax.random.normal(k[2], (class_num, C1, 3, 3), jnp.float32) * 0.05,
        b_conv2=jax.random.normal(k[3], (class_num,), jnp.float32) * 0.05,
        w_fc1=jax.random.normal(k[4], (32, zdim), jnp.float32) * 0.02,
        b_fc1=jax.random.normal(k[5], (32,), jnp.float32) * 0.02,
        # as in STN.__init__: fc_loc[2].weight zeroed, bias = identity affine
        w_fc2=jnp.zeros((6, 32), jnp.float32),
        b_fc2=jnp.array([1.0, 0.0, 0.0, 0.0, 1.0, 0.0], jnp.float32),
    )


def stn_forward(x, params, class_num, return_theta=False):
    B, C, H, W = x.shape
    HW = H * W
    C1 = 8
    CN = class_num
    CP = C if C % 8 == 0 else C + (8 - C % 8)       # sublane-aligned channels
    TB = _pick_tb(B, HW)
    NB = B // TB
    L = TB * HW

    f32 = jnp.float32
    bf16 = jnp.bfloat16

    # ---- input layouts -----------------------------------------------------
    x_img = x.reshape(NB, TB, C, HW).astype(f32)
    # conv path: TB images side by side on the lane axis, channels on sublanes
    x_conv = x_img.transpose(0, 2, 1, 3).reshape(NB, C, L)
    if CP != C:
        x_conv = jnp.pad(x_conv, ((0, 0), (0, CP - C), (0, 0)))
        x_img = jnp.pad(x_img, ((0, 0), (0, 0), (0, CP - C), (0, 0)))
    # sampler path: (image, channel) stacked on sublanes, pixels on lanes
    x_samp = x_img.reshape(NB, TB * CP, HW)

    # ---- resident constants (index maps ignore the grid index) --------------
    p = jnp.arange(L, dtype=jnp.int32) % HW
    jj = p % W
    ii = p // W

    def tap_mask(ksz, crep):
        rad = ksz // 2
        rows = []
        for ky in range(ksz):
            for kx in range(ksz):
                dy, dx = ky - rad, kx - rad
                ok = ((jj + dx >= 0) & (jj + dx < W) &
                      (ii + dy >= 0) & (ii + dy < H)).astype(_TAP_DTYPE)
                rows.append(jnp.broadcast_to(ok[None, :], (crep, L)))
        return jnp.concatenate(rows, axis=0)

    m1 = tap_mask(5, CP)                                        # (25*CP, L)
    m2 = tap_mask(3, C1)                                        # (9*C1,  L)

    coords = jnp.stack(
        [(2.0 * jj.astype(f32) + 1.0) / W - 1.0,
         (2.0 * ii.astype(f32) + 1.0) / H - 1.0], axis=0)       # (2, L)

    e_seg = jnp.repeat(jnp.eye(TB, dtype=f32), HW, axis=1)      # (TB, L)
    e_mat = e_seg.T                                             # (L, TB)

    # ---- weights in matmul-friendly layouts ----------------------------------
    w_c1 = params["w_conv1"]
    if CP != C:
        w_c1 = jnp.pad(w_c1, ((0, 0), (0, CP - C), (0, 0), (0, 0)))
    w1 = w_c1.transpose(0, 2, 3, 1).reshape(C1, 25 * CP).astype(bf16)
    b1 = params["b_conv1"].reshape(C1, 1).astype(f32)
    w2 = params["w_conv2"].transpose(0, 2, 3, 1).reshape(CN, 9 * C1).astype(bf16)
    b2 = params["b_conv2"].reshape(CN, 1).astype(f32)
    # fc1 weight as (CN*32, L): row c*32+o, lane t*HW+p  ->  W_fc1[o, c*HW+p]
    w1l = jnp.tile(
        params["w_fc1"].reshape(32, CN, HW).transpose(1, 0, 2).reshape(CN * 32, HW),
        (1, TB)).astype(f32)
    b1fc = params["b_fc1"].reshape(32, 1).astype(f32)
    w2fc = params["w_fc2"].astype(f32)                          # (6, 32)
    b2fc = params["b_fc2"].reshape(6, 1).astype(f32)

    kernel = functools.partial(_stn_kernel, H=H, W=W, C1=C1, CN=CN, CP=CP, TB=TB)

    def full(a):
        return pl.BlockSpec(a.shape, lambda b: (0,) * a.ndim)

    out_flat, theta_flat = pl.pallas_call(
        kernel,
        out_shape=(jax.ShapeDtypeStruct((NB, CP, L), x.dtype),
                   jax.ShapeDtypeStruct((NB, 6, TB), jnp.float32)),
        grid_spec=pltpu.PrefetchScalarGridSpec(
            num_scalar_prefetch=0,
            grid=(NB,),
            in_specs=[
                pl.BlockSpec((None, CP, L), lambda b: (b, 0, 0)),
                pl.BlockSpec((None, TB * CP, HW), lambda b: (b, 0, 0)),
                full(m1), full(m2), full(w1), full(b1), full(w2), full(b2),
                full(w1l), full(b1fc), full(w2fc), full(b2fc),
                full(e_mat), full(e_seg), full(coords),
            ],
            out_specs=(pl.BlockSpec((None, CP, L), lambda b: (b, 0, 0)),
                       pl.BlockSpec((None, 6, TB), lambda b: (b, 0, 0))),
        ),
        compiler_params=pltpu.CompilerParams(
            dimension_semantics=("parallel",),
            vmem_limit_bytes=min(_vmem_capacity_bytes() // 2, 64 * 1024 * 1024)),
    )(x_conv, x_samp, m1, m2, w1, b1, w2, b2, w1l, b1fc, w2fc, b2fc,
      e_mat, e_seg, coords)

    out = (out_flat[:, :C, :]
           .reshape(NB, C, TB, HW)
           .transpose(0, 2, 1, 3)
           .reshape(B, C, H, W))
    if return_theta:
        theta = theta_flat.transpose(0, 2, 1).reshape(B, 6)
        return out, theta
    return out


# ---------------------------- pure-JAX references ----------------------------
def _ref_theta(x, params):
    dn = ("NCHW", "OIHW", "NCHW")
    a1 = lax.conv_general_dilated(x, params["w_conv1"], (1, 1), [(2, 2), (2, 2)],
                                  dimension_numbers=dn)
    a1 = jax.nn.relu(a1 + params["b_conv1"][None, :, None, None])
    a2 = lax.conv_general_dilated(a1, params["w_conv2"], (1, 1), [(1, 1), (1, 1)],
                                  dimension_numbers=dn)
    a2 = jax.nn.relu(a2 + params["b_conv2"][None, :, None, None])
    xs = a2.reshape(a2.shape[0], -1)
    h = jax.nn.relu(xs @ params["w_fc1"].T + params["b_fc1"])
    return h @ params["w_fc2"].T + params["b_fc2"]              # (B, 6)


def _ref_affine_grid_sample(x, theta):
    B, C, H, W = x.shape
    th = theta.reshape(B, 2, 3)
    xn = (2.0 * jnp.arange(W, dtype=jnp.float32) + 1.0) / W - 1.0
    yn = (2.0 * jnp.arange(H, dtype=jnp.float32) + 1.0) / H - 1.0
    xg, yg = jnp.meshgrid(xn, yn)                                # (H, W)
    base = jnp.stack([xg, yg, jnp.ones_like(xg)], axis=-1)       # (H, W, 3)
    g = jnp.einsum("bkl,hwl->bhwk", th, base)                    # (B, H, W, 2)
    ix = (g[..., 0] + 1.0) * (0.5 * W) - 0.5
    iy = (g[..., 1] + 1.0) * (0.5 * H) - 0.5
    x0 = jnp.floor(ix).astype(jnp.int32)
    y0 = jnp.floor(iy).astype(jnp.int32)
    wx = ix - x0
    wy = iy - y0
    bi = jnp.arange(B)[:, None, None, None]
    ci = jnp.arange(C)[None, :, None, None]

    def corner(xc, yc, wgt):
        ok = ((xc >= 0) & (xc < W) & (yc >= 0) & (yc < H)).astype(x.dtype)
        v = x[bi, ci, jnp.clip(yc, 0, H - 1)[:, None],
              jnp.clip(xc, 0, W - 1)[:, None]]
        return v * (ok * wgt)[:, None]

    return (corner(x0, y0, (1 - wx) * (1 - wy))
            + corner(x0 + 1, y0, wx * (1 - wy))
            + corner(x0, y0 + 1, (1 - wx) * wy)
            + corner(x0 + 1, y0 + 1, wx * wy))


if __name__ == "__main__":
    B, C, H, W = 2, 4, 16, 16
    class_num = 2

    key = jax.random.PRNGKey(0)
    kx, kp, kw = jax.random.split(key, 3)
    x = jax.random.normal(kx, (B, C, H, W), jnp.float32)
    params = init_stn_params(kp, imdim=C, imsize=H, class_num=class_num)

    fwd = jax.jit(functools.partial(stn_forward, class_num=class_num,
                                    return_theta=True))

    # 1) Module default init (fc_loc[2].weight == 0): theta is exactly the
    #    identity affine and grid_sample must reproduce the input.
    out, theta = jax.block_until_ready(fwd(x, params))
    assert out.shape == x.shape and out.dtype == x.dtype
    ident = jnp.tile(jnp.array([1., 0., 0., 0., 1., 0.], jnp.float32), (B, 1))
    assert bool(jnp.allclose(theta, ident, atol=1e-5)), "identity theta failed"
    assert bool(jnp.allclose(out, x, atol=1e-2)), "identity grid_sample failed"

    # 2) Non-zero fc_loc[2].weight exercises the conv/fc localization path
    #    (previously unvalidated) against a pure-JAX f32 reference.
    params2 = dict(params)
    params2["w_fc2"] = 0.05 * jax.random.normal(kw, (6, 32), jnp.float32)
    out2, theta2 = jax.block_until_ready(fwd(x, params2))
    with jax.default_matmul_precision("highest"):
        theta_r = _ref_theta(x, params2)
        out_r = _ref_affine_grid_sample(x, theta_r)
    assert bool(jnp.allclose(theta2, theta_r, atol=5e-3)), \
        "localization theta vs reference failed"
    assert bool(jnp.allclose(out2, out_r, atol=5e-2)), \
        "grid_sample vs reference failed"

    print("KERNEL_OK")
</pallas_src>

<mosaic_0001>
module attributes {stable_mosaic.version = 11 : i64} {
  func.func @_stn_kernel(%arg0: i32, %arg1: memref<1x8x256xf32, #tpu.memory_space<vmem>>, %arg2: memref<1x8x256xf32, #tpu.memory_space<vmem>>, %arg3: memref<200x256xf32, #tpu.memory_space<vmem>>, %arg4: memref<72x256xf32, #tpu.memory_space<vmem>>, %arg5: memref<8x200xbf16, #tpu.memory_space<vmem>>, %arg6: memref<8x1xf32, #tpu.memory_space<vmem>>, %arg7: memref<2x72xbf16, #tpu.memory_space<vmem>>, %arg8: memref<2x1xf32, #tpu.memory_space<vmem>>, %arg9: memref<64x256xf32, #tpu.memory_space<vmem>>, %arg10: memref<32x1xf32, #tpu.memory_space<vmem>>, %arg11: memref<6x32xf32, #tpu.memory_space<vmem>>, %arg12: memref<6x1xf32, #tpu.memory_space<vmem>>, %arg13: memref<256x1xf32, #tpu.memory_space<vmem>>, %arg14: memref<1x256xf32, #tpu.memory_space<vmem>>, %arg15: memref<2x256xf32, #tpu.memory_space<vmem>>, %arg16: memref<1x8x256xf32, #tpu.memory_space<vmem>>, %arg17: memref<1x6x1xf32, #tpu.memory_space<vmem>>) attributes {dimension_semantics = [#tpu.dimension_semantics<parallel>], iteration_bounds = array<i64: 2>, scalar_prefetch = 0 : i64, scratch_operands = 0 : i64, tpu.core_type = #tpu.core_type<tc>, window_params = [{transform_indices = @transform_0, window_bounds = array<i64: 1, 8, 256>}, {transform_indices = @transform_1, window_bounds = array<i64: 1, 8, 256>}, {pipeline_mode = #tpu.pipeline_mode<synchronous>, transform_indices = @transform_2, window_bounds = array<i64: 200, 256>}, {pipeline_mode = #tpu.pipeline_mode<synchronous>, transform_indices = @transform_3, window_bounds = array<i64: 72, 256>}, {pipeline_mode = #tpu.pipeline_mode<synchronous>, transform_indices = @transform_4, window_bounds = array<i64: 8, 200>}, {pipeline_mode = #tpu.pipeline_mode<synchronous>, transform_indices = @transform_5, window_bounds = array<i64: 8, 1>}, {pipeline_mode = #tpu.pipeline_mode<synchronous>, transform_indices = @transform_6, window_bounds = array<i64: 2, 72>}, {pipeline_mode = #tpu.pipeline_mode<synchronous>, transform_indices = @transform_7, window_bounds = array<i64: 2, 1>}, {pipeline_mode = #tpu.pipeline_mode<synchronous>, transform_indices = @transform_8, window_bounds = array<i64: 64, 256>}, {pipeline_mode = #tpu.pipeline_mode<synchronous>, transform_indices = @transform_9, window_bounds = array<i64: 32, 1>}, {pipeline_mode = #tpu.pipeline_mode<synchronous>, transform_indices = @transform_10, window_bounds = array<i64: 6, 32>}, {pipeline_mode = #tpu.pipeline_mode<synchronous>, transform_indices = @transform_11, window_bounds = array<i64: 6, 1>}, {pipeline_mode = #tpu.pipeline_mode<synchronous>, transform_indices = @transform_12, window_bounds = array<i64: 256, 1>}, {pipeline_mode = #tpu.pipeline_mode<synchronous>, transform_indices = @transform_13, window_bounds = array<i64: 1, 256>}, {pipeline_mode = #tpu.pipeline_mode<synchronous>, transform_indices = @transform_14, window_bounds = array<i64: 2, 256>}, {transform_indices = @transform_15, window_bounds = array<i64: 1, 8, 256>}, {transform_indices = @transform_16, window_bounds = array<i64: 1, 6, 1>}]} {
    %c0 = arith.constant 0 : index
    %c0_0 = arith.constant 0 : index
    %c0_1 = arith.constant 0 : index
    %0 = vector.load %arg1[%c0, %c0_0, %c0_1] : memref<1x8x256xf32, #tpu.memory_space<vmem>>, vector<1x8x256xf32>
    %1 = vector.shape_cast %0 : vector<1x8x256xf32> to vector<8x256xf32>
    %c34_i32 = arith.constant 34 : i32
    %2 = tpu.dynamic_rotate %1 by %c34_i32 dim 1 : vector<8x256xf32>, i32 -> vector<8x256xf32>
    %c33_i32 = arith.constant 33 : i32
    %3 = tpu.dynamic_rotate %1 by %c33_i32 dim 1 : vector<8x256xf32>, i32 -> vector<8x256xf32>
    %c32_i32 = arith.constant 32 : i32
    %4 = tpu.dynamic_rotate %1 by %c32_i32 dim 1 : vector<8x256xf32>, i32 -> vector<8x256xf32>
    %c31_i32 = arith.constant 31 : i32
    %5 = tpu.dynamic_rotate %1 by %c31_i32 dim 1 : vector<8x256xf32>, i32 -> vector<8x256xf32>
    %c30_i32 = arith.constant 30 : i32
    %6 = tpu.dynamic_rotate %1 by %c30_i32 dim 1 : vector<8x256xf32>, i32 -> vector<8x256xf32>
    %c18_i32 = arith.constant 18 : i32
    %7 = tpu.dynamic_rotate %1 by %c18_i32 dim 1 : vector<8x256xf32>, i32 -> vector<8x256xf32>
    %c17_i32 = arith.constant 17 : i32
    %8 = tpu.dynamic_rotate %1 by %c17_i32 dim 1 : vector<8x256xf32>, i32 -> vector<8x256xf32>
    %c16_i32 = arith.constant 16 : i32
    %9 = tpu.dynamic_rotate %1 by %c16_i32 dim 1 : vector<8x256xf32>, i32 -> vector<8x256xf32>
    %c15_i32 = arith.constant 15 : i32
    %10 = tpu.dynamic_rotate %1 by %c15_i32 dim 1 : vector<8x256xf32>, i32 -> vector<8x256xf32>
    %c14_i32 = arith.constant 14 : i32
    %11 = tpu.dynamic_rotate %1 by %c14_i32 dim 1 : vector<8x256xf32>, i32 -> vector<8x256xf32>
    %c2_i32 = arith.constant 2 : i32
    %12 = tpu.dynamic_rotate %1 by %c2_i32 dim 1 : vector<8x256xf32>, i32 -> vector<8x256xf32>
    %c1_i32 = arith.constant 1 : i32
    %13 = tpu.dynamic_rotate %1 by %c1_i32 dim 1 : vector<8x256xf32>, i32 -> vector<8x256xf32>
    %c255_i32 = arith.constant 255 : i32
    %14 = tpu.dynamic_rotate %1 by %c255_i32 dim 1 : vector<8x256xf32>, i32 -> vector<8x256xf32>
    %c254_i32 = arith.constant 254 : i32
    %15 = tpu.dynamic_rotate %1 by %c254_i32 dim 1 : vector<8x256xf32>, i32 -> vector<8x256xf32>
    %c242_i32 = arith.constant 242 : i32
    %16 = tpu.dynamic_rotate %1 by %c242_i32 dim 1 : vector<8x256xf32>, i32 -> vector<8x256xf32>
    %c241_i32 = arith.constant 241 : i32
    %17 = tpu.dynamic_rotate %1 by %c241_i32 dim 1 : vector<8x256xf32>, i32 -> vector<8x256xf32>
    %c240_i32 = arith.constant 240 : i32
    %18 = tpu.dynamic_rotate %1 by %c240_i32 dim 1 : vector<8x256xf32>, i32 -> vector<8x256xf32>
    %c239_i32 = arith.constant 239 : i32
    %19 = tpu.dynamic_rotate %1 by %c239_i32 dim 1 : vector<8x256xf32>, i32 -> vector<8x256xf32>
    %c238_i32 = arith.constant 238 : i32
    %20 = tpu.dynamic_rotate %1 by %c238_i32 dim 1 : vector<8x256xf32>, i32 -> vector<8x256xf32>
    %c226_i32 = arith.constant 226 : i32
    %21 = tpu.dynamic_rotate %1 by %c226_i32 dim 1 : vector<8x256xf32>, i32 -> vector<8x256xf32>
    %c225_i32 = arith.constant 225 : i32
    %22 = tpu.dynamic_rotate %1 by %c225_i32 dim 1 : vector<8x256xf32>, i32 -> vector<8x256xf32>
    %c224_i32 = arith.constant 224 : i32
    %23 = tpu.dynamic_rotate %1 by %c224_i32 dim 1 : vector<8x256xf32>, i32 -> vector<8x256xf32>
    %c223_i32 = arith.constant 223 : i32
    %24 = tpu.dynamic_rotate %1 by %c223_i32 dim 1 : vector<8x256xf32>, i32 -> vector<8x256xf32>
    %c222_i32 = arith.constant 222 : i32
    %25 = tpu.dynamic_rotate %1 by %c222_i32 dim 1 : vector<8x256xf32>, i32 -> vector<8x256xf32>
    %26 = tpu.concatenate %2, %3, %4, %5, %6, %7, %8, %9, %10, %11, %12, %13, %1, %14, %15, %16 in 0 : vector<8x256xf32>, vector<8x256xf32>, vector<8x256xf32>, vector<8x256xf32>, vector<8x256xf32>, vector<8x256xf32>, vector<8x256xf32>, vector<8x256xf32>, vector<8x256xf32>, vector<8x256xf32>, vector<8x256xf32>, vector<8x256xf32>, vector<8x256xf32>, vector<8x256xf32>, vector<8x256xf32>, vector<8x256xf32> -> vector<128x256xf32>
    %27 = tpu.concatenate %17, %18, %19, %20, %21, %22, %23, %24, %25 in 0 : vector<8x256xf32>, vector<8x256xf32>, vector<8x256xf32>, vector<8x256xf32>, vector<8x256xf32>, vector<8x256xf32>, vector<8x256xf32>, vector<8x256xf32>, vector<8x256xf32> -> vector<72x256xf32>
    %28 = tpu.concatenate %26, %27 in 0 : vector<128x256xf32>, vector<72x256xf32> -> vector<200x256xf32>
    %c0_2 = arith.constant 0 : index
    %c0_3 = arith.constant 0 : index
    %29 = vector.load %arg3[%c0_2, %c0_3] : memref<200x256xf32, #tpu.memory_space<vmem>>, vector<200x256xf32>
    %30 = arith.mulf %28, %29 : vector<200x256xf32>
    %31 = arith.truncf %30 : vector<200x256xf32> to vector<200x256xbf16>
    %c0_4 = arith.constant 0 : index
    %c0_5 = arith.constant 0 : index
    %32 = vector.load %arg5[%c0_4, %c0_5] : memref<8x200xbf16, #tpu.memory_space<vmem>>, vector<8x200xbf16>
    %cst = arith.constant dense<0.000000e+00> : vector<8x256xf32>
    %33 = tpu.matmul %32, %31, %cst {dimension_numbers = #tpu.dot_dimension_numbers<[1], [0], [0], [1], [0, 0, 1, 1], [], []>} : vector<8x200xbf16>, vector<200x256xbf16>, vector<8x256xf32> -> vector<8x256xf32>
    %c0_6 = arith.constant 0 : index
    %c0_7 = arith.constant 0 : index
    %34 = vector.load %arg6[%c0_6, %c0_7] : memref<8x1xf32, #tpu.memory_space<vmem>>, vector<8x1xf32>
    %35 = vector.broadcast %34 : vector<8x1xf32> to vector<8x256xf32>
    %36 = arith.addf %33, %35 : vector<8x256xf32>
    %cst_8 = arith.constant 0.000000e+00 : f32
    %37 = vector.broadcast %cst_8 : f32 to vector<8x256xf32>
    %38 = arith.maximumf %36, %37 : vector<8x256xf32>
    %c17_i32_9 = arith.constant 17 : i32
    %39 = tpu.dynamic_rotate %38 by %c17_i32_9 dim 1 : vector<8x256xf32>, i32 -> vector<8x256xf32>
    %c16_i32_10 = arith.constant 16 : i32
    %40 = tpu.dynamic_rotate %38 by %c16_i32_10 dim 1 : vector<8x256xf32>, i32 -> vector<8x256xf32>
    %c15_i32_11 = arith.constant 15 : i32
    %41 = tpu.dynamic_rotate %38 by %c15_i32_11 dim 1 : vector<8x256xf32>, i32 -> vector<8x256xf32>
    %c1_i32_12 = arith.constant 1 : i32
    %42 = tpu.dynamic_rotate %38 by %c1_i32_12 dim 1 : vector<8x256xf32>, i32 -> vector<8x256xf32>
    %c255_i32_13 = arith.constant 255 : i32
    %43 = tpu.dynamic_rotate %38 by %c255_i32_13 dim 1 : vector<8x256xf32>, i32 -> vector<8x256xf32>
    %c241_i32_14 = arith.constant 241 : i32
    %44 = tpu.dynamic_rotate %38 by %c241_i32_14 dim 1 : vector<8x256xf32>, i32 -> vector<8x256xf32>
    %c240_i32_15 = arith.constant 240 : i32
    %45 = tpu.dynamic_rotate %38 by %c240_i32_15 dim 1 : vector<8x256xf32>, i32 -> vector<8x256xf32>
    %c239_i32_16 = arith.constant 239 : i32
    %46 = tpu.dynamic_rotate %38 by %c239_i32_16 dim 1 : vector<8x256xf32>, i32 -> vector<8x256xf32>
    %47 = tpu.concatenate %39, %40, %41, %42, %38, %43, %44, %45, %46 in 0 : vector<8x256xf32>, vector<8x256xf32>, vector<8x256xf32>, vector<8x256xf32>, vector<8x256xf32>, vector<8x256xf32>, vector<8x256xf32>, vector<8x256xf32>, vector<8x256xf32> -> vector<72x256xf32>
    %c0_17 = arith.constant 0 : index
    %c0_18 = arith.constant 0 : index
    %48 = vector.load %arg4[%c0_17, %c0_18] : memref<72x256xf32, #tpu.memory_space<vmem>>, vector<72x256xf32>
    %49 = arith.mulf %47, %48 : vector<72x256xf32>
    %50 = arith.truncf %49 : vector<72x256xf32> to vector<72x256xbf16>
    %c0_19 = arith.constant 0 : index
    %c0_20 = arith.constant 0 : index
    %51 = vector.load %arg7[%c0_19, %c0_20] : memref<2x72xbf16, #tpu.memory_space<vmem>>, vector<2x72xbf16>
    %cst_21 = arith.constant dense<0.000000e+00> : vector<2x256xf32>
    %52 = tpu.matmul %51, %50, %cst_21 {dimension_numbers = #tpu.dot_dimension_numbers<[1], [0], [0], [1], [0, 0, 1, 1], [], []>} : vector<2x72xbf16>, vector<72x256xbf16>, vector<2x256xf32> -> vector<2x256xf32>
    %c0_22 = arith.constant 0 : index
    %c0_23 = arith.constant 0 : index
    %53 = vector.load %arg8[%c0_22, %c0_23] : memref<2x1xf32, #tpu.memory_space<vmem>>, vector<2x1xf32>
    %54 = vector.broadcast %53 : vector<2x1xf32> to vector<2x256xf32>
    %55 = arith.addf %52, %54 : vector<2x256xf32>
    %cst_24 = arith.constant 0.000000e+00 : f32
    %56 = vector.broadcast %cst_24 : f32 to vector<2x256xf32>
    %57 = arith.maximumf %55, %56 : vector<2x256xf32>
    %58 = vector.extract_strided_slice %57 {offsets = [0, 0], sizes = [1, 256], strides = [1, 1]} : vector<2x256xf32> to vector<1x256xf32>
    %c0_25 = arith.constant 0 : index
    %c0_26 = arith.constant 0 : index
    %59 = vector.load %arg9[%c0_25, %c0_26] : memref<64x256xf32, #tpu.memory_space<vmem>>, vector<32x256xf32>
    %60 = vector.broadcast %58 : vector<1x256xf32> to vector<32x256xf32>
    %61 = arith.mulf %60, %59 : vector<32x256xf32>
    %62 = vector.extract_strided_slice %57 {offsets = [1, 0], sizes = [1, 256], strides = [1, 1]} : vector<2x256xf32> to vector<1x256xf32>
    %c32 = arith.constant 32 : index
    %c0_27 = arith.constant 0 : index
    %63 = vector.load %arg9[%c32, %c0_27] : memref<64x256xf32, #tpu.memory_space<vmem>>, vector<32x256xf32>
    %64 = vector.broadcast %62 : vector<1x256xf32> to vector<32x256xf32>
    %65 = arith.mulf %64, %63 : vector<32x256xf32>
    %66 = arith.addf %61, %65 : vector<32x256xf32>
    %cst_28 = arith.constant dense<0.000000e+00> : vector<32xf32>
    %67 = vector.multi_reduction <add>, %66, %cst_28 [1] : vector<32x256xf32> to vector<32xf32>
    %68 = vector.shape_cast %67 : vector<32xf32> to vector<32x1xf32>
    %c0_29 = arith.constant 0 : index
    %c0_30 = arith.constant 0 : index
    %69 = vector.load %arg10[%c0_29, %c0_30] : memref<32x1xf32, #tpu.memory_space<vmem>>, vector<32x1xf32>
    %70 = arith.addf %68, %69 : vector<32x1xf32>
    %cst_31 = arith.constant 0.000000e+00 : f32
    %71 = vector.broadcast %cst_31 : f32 to vector<32x1xf32>
    %72 = arith.maximumf %70, %71 : vector<32x1xf32>
    %c0_32 = arith.constant 0 : index
    %c0_33 = arith.constant 0 : index
    %73 = vector.load %arg11[%c0_32, %c0_33] : memref<6x32xf32, #tpu.memory_space<vmem>>, vector<6x32xf32>
    %cst_34 = arith.constant dense<0.000000e+00> : vector<6x1xf32>
    %74 = tpu.matmul %73, %72, %cst_34 {dimension_numbers = #tpu.dot_dimension_numbers<[1], [0], [0], [1], [0, 0, 1, 1], [], []>} : vector<6x32xf32>, vector<32x1xf32>, vector<6x1xf32> -> vector<6x1xf32>
    %c0_35 = arith.constant 0 : index
    %c0_36 = arith.constant 0 : index
    %75 = vector.load %arg12[%c0_35, %c0_36] : memref<6x1xf32, #tpu.memory_space<vmem>>, vector<6x1xf32>
    %76 = arith.addf %74, %75 : vector<6x1xf32>
    %c0_37 = arith.constant 0 : index
    %c0_38 = arith.constant 0 : index
    %c0_39 = arith.constant 0 : index
    %77 = vector.load %arg17[%c0_37, %c0_38, %c0_39] : memref<1x6x1xf32, #tpu.memory_space<vmem>>, vector<1x6x1xf32>
    %78 = vector.shape_cast %77 : vector<1x6x1xf32> to vector<6x1xf32>
    %79 = vector.shape_cast %76 : vector<6x1xf32> to vector<1x6x1xf32>
    tpu.vector_store %arg17[%c0_37, %c0_38, %c0_39], %79 {strides = array<i32>} : memref<1x6x1xf32, #tpu.memory_space<vmem>>, vector<1x6x1xf32>,
    %80 = vector.shape_cast %76 : vector<6x1xf32> to vector<6x1xf32>
    %81 = vector.broadcast %80 : vector<6x1xf32> to vector<6x256xf32>
    %c0_40 = arith.constant 0 : index
    %c0_41 = arith.constant 0 : index
    %82 = vector.load %arg15[%c0_40, %c0_41] : memref<2x256xf32, #tpu.memory_space<vmem>>, vector<1x256xf32>
    %c1 = arith.constant 1 : index
    %c0_42 = arith.constant 0 : index
    %83 = vector.load %arg15[%c1, %c0_42] : memref<2x256xf32, #tpu.memory_space<vmem>>, vector<1x256xf32>
    %84 = vector.extract_strided_slice %81 {offsets = [0, 0], sizes = [1, 256], strides = [1, 1]} : vector<6x256xf32> to vector<1x256xf32>
    %85 = arith.mulf %84, %82 : vector<1x256xf32>
    %86 = vector.extract_strided_slice %81 {offsets = [1, 0], sizes = [1, 256], strides = [1, 1]} : vector<6x256xf32> to vector<1x256xf32>
    %87 = arith.mulf %86, %83 : vector<1x256xf32>
    %88 = arith.addf %85, %87 : vector<1x256xf32>
    %89 = vector.extract_strided_slice %81 {offsets = [2, 0], sizes = [1, 256], strides = [1, 1]} : vector<6x256xf32> to vector<1x256xf32>
    %90 = arith.addf %88, %89 : vector<1x256xf32>
    %91 = vector.extract_strided_slice %81 {offsets = [3, 0], sizes = [1, 256], strides = [1, 1]} : vector<6x256xf32> to vector<1x256xf32>
    %92 = arith.mulf %91, %82 : vector<1x256xf32>
    %93 = vector.extract_strided_slice %81 {offsets = [4, 0], sizes = [1, 256], strides = [1, 1]} : vector<6x256xf32> to vector<1x256xf32>
    %94 = arith.mulf %93, %83 : vector<1x256xf32>
    %95 = arith.addf %92, %94 : vector<1x256xf32>
    %96 = vector.extract_strided_slice %81 {offsets = [5, 0], sizes = [1, 256], strides = [1, 1]} : vector<6x256xf32> to vector<1x256xf32>
    %97 = arith.addf %95, %96 : vector<1x256xf32>
    %cst_43 = arith.constant 1.000000e+00 : f32
    %98 = vector.broadcast %cst_43 : f32 to vector<1x256xf32>
    %99 = arith.addf %90, %98 : vector<1x256xf32>
    %cst_44 = arith.constant 8.000000e+00 : f32
    %100 = vector.broadcast %cst_44 : f32 to vector<1x256xf32>
    %101 = arith.mulf %99, %100 : vector<1x256xf32>
    %cst_45 = arith.constant 5.000000e-01 : f32
    %102 = vector.broadcast %cst_45 : f32 to vector<1x256xf32>
    %103 = arith.subf %101, %102 : vector<1x256xf32>
    %cst_46 = arith.constant 1.000000e+00 : f32
    %104 = vector.broadcast %cst_46 : f32 to vector<1x256xf32>
    %105 = arith.addf %97, %104 : vector<1x256xf32>
    %cst_47 = arith.constant 8.000000e+00 : f32
    %106 = vector.broadcast %cst_47 : f32 to vector<1x256xf32>
    %107 = arith.mulf %105, %106 : vector<1x256xf32>
    %cst_48 = arith.constant 5.000000e-01 : f32
    %108 = vector.broadcast %cst_48 : f32 to vector<1x256xf32>
    %109 = arith.subf %107, %108 : vector<1x256xf32>
    %110 = math.floor %103 : vector<1x256xf32>
    %111 = math.floor %109 : vector<1x256xf32>
    %112 = arith.subf %103, %110 : vector<1x256xf32>
    %113 = arith.subf %109, %111 : vector<1x256xf32>
    %114 = arith.fptosi %110 : vector<1x256xf32> to vector<1x256xi32>
    %115 = arith.fptosi %111 : vector<1x256xf32> to vector<1x256xi32>
    %c1_i32_49 = arith.constant 1 : i32
    %116 = vector.broadcast %c1_i32_49 : i32 to vector<1x256xi32>
    %117 = arith.addi %114, %116 : vector<1x256xi32>
    %c1_i32_50 = arith.constant 1 : i32
    %118 = vector.broadcast %c1_i32_50 : i32 to vector<1x256xi32>
    %119 = arith.addi %115, %118 : vector<1x256xi32>
    %cst_51 = arith.constant 1.000000e+00 : f32
    %120 = vector.broadcast %cst_51 : f32 to vector<1x256xf32>
    %121 = arith.subf %120, %112 : vector<1x256xf32>
    %cst_52 = arith.constant 1.000000e+00 : f32
    %122 = vector.broadcast %cst_52 : f32 to vector<1x256xf32>
    %123 = arith.subf %122, %113 : vector<1x256xf32>
    %124 = arith.mulf %121, %123 : vector<1x256xf32>
    %c0_i32 = arith.constant 0 : i32
    %125 = vector.broadcast %c0_i32 : i32 to vector<1x256xi32>
    %126 = arith.cmpi sge, %114, %125 : vector<1x256xi32>
    %c16_i32_53 = arith.constant 16 : i32
    %127 = vector.broadcast %c16_i32_53 : i32 to vector<1x256xi32>
    %128 = arith.cmpi slt, %114, %127 : vector<1x256xi32>
    %129 = arith.andi %126, %128 : vector<1x256xi1>
    %c0_i32_54 = arith.constant 0 : i32
    %130 = vector.broadcast %c0_i32_54 : i32 to vector<1x256xi32>
    %131 = arith.cmpi sge, %115, %130 : vector<1x256xi32>
    %132 = arith.andi %129, %131 : vector<1x256xi1>
    %c16_i32_55 = arith.constant 16 : i32
    %133 = vector.broadcast %c16_i32_55 : i32 to vector<1x256xi32>
    %134 = arith.cmpi slt, %115, %133 : vector<1x256xi32>
    %135 = arith.andi %132, %134 : vector<1x256xi1>
    %cst_56 = arith.constant 0.000000e+00 : f32
    %136 = vector.broadcast %cst_56 : f32 to vector<1x256xf32>
    %137 = arith.select %135, %124, %136 : vector<1x256xi1>, vector<1x256xf32>
    %cst_57 = arith.constant 1.000000e+00 : f32
    %138 = vector.broadcast %cst_57 : f32 to vector<1x256xf32>
    %139 = arith.subf %138, %113 : vector<1x256xf32>
    %140 = arith.mulf %112, %139 : vector<1x256xf32>
    %c0_i32_58 = arith.constant 0 : i32
    %141 = vector.broadcast %c0_i32_58 : i32 to vector<1x256xi32>
    %142 = arith.cmpi sge, %117, %141 : vector<1x256xi32>
    %c16_i32_59 = arith.constant 16 : i32
    %143 = vector.broadcast %c16_i32_59 : i32 to vector<1x256xi32>
    %144 = arith.cmpi slt, %117, %143 : vector<1x256xi32>
    %145 = arith.andi %142, %144 : vector<1x256xi1>
    %c0_i32_60 = arith.constant 0 : i32
    %146 = vector.broadcast %c0_i32_60 : i32 to vector<1x256xi32>
    %147 = arith.cmpi sge, %115, %146 : vector<1x256xi32>
    %148 = arith.andi %145, %147 : vector<1x256xi1>
    %c16_i32_61 = arith.constant 16 : i32
    %149 = vector.broadcast %c16_i32_61 : i32 to vector<1x256xi32>
    %150 = arith.cmpi slt, %115, %149 : vector<1x256xi32>
    %151 = arith.andi %148, %150 : vector<1x256xi1>
    %cst_62 = arith.constant 0.000000e+00 : f32
    %152 = vector.broadcast %cst_62 : f32 to vector<1x256xf32>
    %153 = arith.select %151, %140, %152 : vector<1x256xi1>, vector<1x256xf32>
    %cst_63 = arith.constant 1.000000e+00 : f32
    %154 = vector.broadcast %cst_63 : f32 to vector<1x256xf32>
    %155 = arith.subf %154, %112 : vector<1x256xf32>
    %156 = arith.mulf %155, %113 : vector<1x256xf32>
    %c0_i32_64 = arith.constant 0 : i32
    %157 = vector.broadcast %c0_i32_64 : i32 to vector<1x256xi32>
    %158 = arith.cmpi sge, %114, %157 : vector<1x256xi32>
    %c16_i32_65 = arith.constant 16 : i32
    %159 = vector.broadcast %c16_i32_65 : i32 to vector<1x256xi32>
    %160 = arith.cmpi slt, %114, %159 : vector<1x256xi32>
    %161 = arith.andi %158, %160 : vector<1x256xi1>
    %c0_i32_66 = arith.constant 0 : i32
    %162 = vector.broadcast %c0_i32_66 : i32 to vector<1x256xi32>
    %163 = arith.cmpi sge, %119, %162 : vector<1x256xi32>
    %164 = arith.andi %161, %163 : vector<1x256xi1>
    %c16_i32_67 = arith.constant 16 : i32
    %165 = vector.broadcast %c16_i32_67 : i32 to vector<1x256xi32>
    %166 = arith.cmpi slt, %119, %165 : vector<1x256xi32>
    %167 = arith.andi %164, %166 : vector<1x256xi1>
    %cst_68 = arith.constant 0.000000e+00 : f32
    %168 = vector.broadcast %cst_68 : f32 to vector<1x256xf32>
    %169 = arith.select %167, %156, %168 : vector<1x256xi1>, vector<1x256xf32>
    %170 = arith.mulf %112, %113 : vector<1x256xf32>
    %c0_i32_69 = arith.constant 0 : i32
    %171 = vector.broadcast %c0_i32_69 : i32 to vector<1x256xi32>
    %172 = arith.cmpi sge, %117, %171 : vector<1x256xi32>
    %c16_i32_70 = arith.constant 16 : i32
    %173 = vector.broadcast %c16_i32_70 : i32 to vector<1x256xi32>
    %174 = arith.cmpi slt, %117, %173 : vector<1x256xi32>
    %175 = arith.andi %172, %174 : vector<1x256xi1>
    %c0_i32_71 = arith.constant 0 : i32
    %176 = vector.broadcast %c0_i32_71 : i32 to vector<1x256xi32>
    %177 = arith.cmpi sge, %119, %176 : vector<1x256xi32>
    %178 = arith.andi %175, %177 : vector<1x256xi1>
    %c16_i32_72 = arith.constant 16 : i32
    %179 = vector.broadcast %c16_i32_72 : i32 to vector<1x256xi32>
    %180 = arith.cmpi slt, %119, %179 : vector<1x256xi32>
    %181 = arith.andi %178, %180 : vector<1x256xi1>
    %cst_73 = arith.constant 0.000000e+00 : f32
    %182 = vector.broadcast %cst_73 : f32 to vector<1x256xf32>
    %183 = arith.select %181, %170, %182 : vector<1x256xi1>, vector<1x256xf32>
    %c16_i32_74 = arith.constant 16 : i32
    %184 = vector.broadcast %c16_i32_74 : i32 to vector<1x256xi32>
    %185 = arith.muli %115, %184 : vector<1x256xi32>
    %186 = arith.addi %185, %114 : vector<1x256xi32>
    %c256_i32 = arith.constant 256 : i32
    %c0_i32_75 = arith.constant 0 : i32
    %187 = arith.cmpi eq, %c256_i32, %c0_i32_75 : i32
    %c1_i32_76 = arith.constant 1 : i32
    %188 = arith.select %187, %c1_i32_76, %c256_i32 : i32
    %189 = vector.broadcast %188 : i32 to vector<1x256xi32>
    %190 = arith.remsi %186, %189 : vector<1x256xi32>
    %c0_i32_77 = arith.constant 0 : i32
    %191 = vector.broadcast %c0_i32_77 : i32 to vector<1x256xi32>
    %192 = arith.cmpi ne, %190, %191 : vector<1x256xi32>
    %c0_i32_78 = arith.constant 0 : i32
    %193 = vector.broadcast %c0_i32_78 : i32 to vector<1x256xi32>
    %194 = arith.cmpi slt, %190, %193 : vector<1x256xi32>
    %c0_i32_79 = arith.constant 0 : i32
    %195 = arith.cmpi slt, %188, %c0_i32_79 : i32
    %196 = vector.broadcast %195 : i1 to vector<1x256xi1>
    %197 = vector.broadcast %196 : vector<1x256xi1> to vector<1x256xi1>
    %198 = arith.xori %194, %197 : vector<1x256xi1>
    %199 = arith.andi %198, %192 : vector<1x256xi1>
    %200 = vector.broadcast %188 : i32 to vector<1x256xi32>
    %201 = arith.addi %190, %200 : vector<1x256xi32>
    %202 = arith.select %199, %201, %190 : vector<1x256xi1>, vector<1x256xi32>
    %203 = tpu.iota {dimensions = array<i32: 0>} : vector<256x256xi32>
    %204 = vector.broadcast %202 : vector<1x256xi32> to vector<256x256xi32>
    %205 = arith.cmpi eq, %203, %204 : vector<256x256xi32>
    %cst_80 = arith.constant 1.000000e+00 : f32
    %cst_81 = arith.constant 0.000000e+00 : f32
    %206 = vector.broadcast %cst_80 : f32 to vector<256x256xf32>
    %207 = vector.broadcast %cst_81 : f32 to vector<256x256xf32>
    %208 = arith.select %205, %206, %207 : vector<256x256xi1>, vector<256x256xf32>
    %209 = vector.broadcast %137 : vector<1x256xf32> to vector<256x256xf32>
    %210 = arith.mulf %208, %209 : vector<256x256xf32>
    %c1_i32_82 = arith.constant 1 : i32
    %211 = tpu.dynamic_rotate %208 by %c1_i32_82 dim 0 : vector<256x256xf32>, i32 -> vector<256x256xf32>
    %212 = vector.broadcast %153 : vector<1x256xf32> to vector<256x256xf32>
    %213 = arith.mulf %211, %212 : vector<256x256xf32>
    %214 = arith.addf %210, %213 : vector<256x256xf32>
    %c16_i32_83 = arith.constant 16 : i32
    %215 = tpu.dynamic_rotate %208 by %c16_i32_83 dim 0 : vector<256x256xf32>, i32 -> vector<256x256xf32>
    %216 = vector.broadcast %169 : vector<1x256xf32> to vector<256x256xf32>
    %217 = arith.mulf %215, %216 : vector<256x256xf32>
    %218 = arith.addf %214, %217 : vector<256x256xf32>
    %c17_i32_84 = arith.constant 17 : i32
    %219 = tpu.dynamic_rotate %208 by %c17_i32_84 dim 0 : vector<256x256xf32>, i32 -> vector<256x256xf32>
    %220 = vector.broadcast %183 : vector<1x256xf32> to vector<256x256xf32>
    %221 = arith.mulf %219, %220 : vector<256x256xf32>
    %222 = arith.addf %218, %221 : vector<256x256xf32>
    %c0_85 = arith.constant 0 : index
    %c0_86 = arith.constant 0 : index
    %c0_87 = arith.constant 0 : index
    %223 = vector.load %arg2[%c0_85, %c0_86, %c0_87] : memref<1x8x256xf32, #tpu.memory_space<vmem>>, vector<1x8x256xf32>
    %224 = vector.shape_cast %223 : vector<1x8x256xf32> to vector<8x256xf32>
    %cst_88 = arith.constant dense<0.000000e+00> : vector<8x256xf32>
    %225 = tpu.matmul %224, %222, %cst_88 {dimension_numbers = #tpu.dot_dimension_numbers<[1], [0], [0], [1], [0, 0, 1, 1], [], []>} : vector<8x256xf32>, vector<256x256xf32>, vector<8x256xf32> -> vector<8x256xf32>
    %c0_89 = arith.constant 0 : index
    %c0_90 = arith.constant 0 : index
    %c0_91 = arith.constant 0 : index
    %226 = vector.load %arg16[%c0_89, %c0_90, %c0_91] : memref<1x8x256xf32, #tpu.memory_space<vmem>>, vector<1x8x256xf32>
    %227 = vector.shape_cast %226 : vector<1x8x256xf32> to vector<8x256xf32>
    %228 = vector.shape_cast %225 : vector<8x256xf32> to vector<1x8x256xf32>
    tpu.vector_store %arg16[%c0_89, %c0_90, %c0_91], %228 {strides = array<i32>} : memref<1x8x256xf32, #tpu.memory_space<vmem>>, vector<1x8x256xf32>,
    return
  }
  func.func @transform_0(%arg0: i32) -> (i32, i32, i32) {
    %c0_i32 = arith.constant 0 : i32
    %c0_i32_0 = arith.constant 0 : i32
    %c0_i32_1 = arith.constant 0 : i32
    return %arg0, %c0_i32, %c0_i32_0 : i32, i32, i32
  }
  func.func @transform_1(%arg0: i32) -> (i32, i32, i32) {
    %c0_i32 = arith.constant 0 : i32
    %c0_i32_0 = arith.constant 0 : i32
    %c0_i32_1 = arith.constant 0 : i32
    return %arg0, %c0_i32, %c0_i32_0 : i32, i32, i32
  }
  func.func @transform_2(%arg0: i32) -> (i32, i32) {
    %c0_i32 = arith.constant 0 : i32
    %c0_i32_0 = arith.constant 0 : i32
    %c0_i32_1 = arith.constant 0 : i32
    return %c0_i32, %c0_i32_0 : i32, i32
  }
  func.func @transform_3(%arg0: i32) -> (i32, i32) {
    %c0_i32 = arith.constant 0 : i32
    %c0_i32_0 = arith.constant 0 : i32
    %c0_i32_1 = arith.constant 0 : i32
    return %c0_i32, %c0_i32_0 : i32, i32
  }
  func.func @transform_4(%arg0: i32) -> (i32, i32) {
    %c0_i32 = arith.constant 0 : i32
    %c0_i32_0 = arith.constant 0 : i32
    %c0_i32_1 = arith.constant 0 : i32
    return %c0_i32, %c0_i32_0 : i32, i32
  }
  func.func @transform_5(%arg0: i32) -> (i32, i32) {
    %c0_i32 = arith.constant 0 : i32
    %c0_i32_0 = arith.constant 0 : i32
    %c0_i32_1 = arith.constant 0 : i32
    return %c0_i32, %c0_i32_0 : i32, i32
  }
  func.func @transform_6(%arg0: i32) -> (i32, i32) {
    %c0_i32 = arith.constant 0 : i32
    %c0_i32_0 = arith.constant 0 : i32
    %c0_i32_1 = arith.constant 0 : i32
    return %c0_i32, %c0_i32_0 : i32, i32
  }
  func.func @transform_7(%arg0: i32) -> (i32, i32) {
    %c0_i32 = arith.constant 0 : i32
    %c0_i32_0 = arith.constant 0 : i32
    %c0_i32_1 = arith.constant 0 : i32
    return %c0_i32, %c0_i32_0 : i32, i32
  }
  func.func @transform_8(%arg0: i32) -> (i32, i32) {
    %c0_i32 = arith.constant 0 : i32
    %c0_i32_0 = arith.constant 0 : i32
    %c0_i32_1 = arith.constant 0 : i32
    return %c0_i32, %c0_i32_0 : i32, i32
  }
  func.func @transform_9(%arg0: i32) -> (i32, i32) {
    %c0_i32 = arith.constant 0 : i32
    %c0_i32_0 = arith.constant 0 : i32
    %c0_i32_1 = arith.constant 0 : i32
    return %c0_i32, %c0_i32_0 : i32, i32
  }
  func.func @transform_10(%arg0: i32) -> (i32, i32) {
    %c0_i32 = arith.constant 0 : i32
    %c0_i32_0 = arith.constant 0 : i32
    %c0_i32_1 = arith.constant 0 : i32
    return %c0_i32, %c0_i32_0 : i32, i32
  }
  func.func @transform_11(%arg0: i32) -> (i32, i32) {
    %c0_i32 = arith.constant 0 : i32
    %c0_i32_0 = arith.constant 0 : i32
    %c0_i32_1 = arith.constant 0 : i32
    return %c0_i32, %c0_i32_0 : i32, i32
  }
  func.func @transform_12(%arg0: i32) -> (i32, i32) {
    %c0_i32 = arith.constant 0 : i32
    %c0_i32_0 = arith.constant 0 : i32
    %c0_i32_1 = arith.constant 0 : i32
    return %c0_i32, %c0_i32_0 : i32, i32
  }
  func.func @transform_13(%arg0: i32) -> (i32, i32) {
    %c0_i32 = arith.constant 0 : i32
    %c0_i32_0 = arith.constant 0 : i32
    %c0_i32_1 = arith.constant 0 : i32
    return %c0_i32, %c0_i32_0 : i32, i32
  }
  func.func @transform_14(%arg0: i32) -> (i32, i32) {
    %c0_i32 = arith.constant 0 : i32
    %c0_i32_0 = arith.constant 0 : i32
    %c0_i32_1 = arith.constant 0 : i32
    return %c0_i32, %c0_i32_0 : i32, i32
  }
  func.func @transform_15(%arg0: i32) -> (i32, i32, i32) {
    %c0_i32 = arith.constant 0 : i32
    %c0_i32_0 = arith.constant 0 : i32
    %c0_i32_1 = arith.constant 0 : i32
    return %arg0, %c0_i32, %c0_i32_0 : i32, i32, i32
  }
  func.func @transform_16(%arg0: i32) -> (i32, i32, i32) {
    %c0_i32 = arith.constant 0 : i32
    %c0_i32_0 = arith.constant 0 : i32
    %c0_i32_1 = arith.constant 0 : i32
    return %arg0, %c0_i32, %c0_i32_0 : i32, i32, i32
  }
}

</mosaic_0001>

<llo_original>
// kernel: stn_forward.1
$region0: #{stn_forward.1}
  #allocation0 [shape = 'u32[]', space=smem, size = 0x4, offset = 0x4, fixed_abs, tag = 'smem constant byte address 0x4 - core index']
  #allocation1 [shape = 'u32[144,128]{1,0:T(1,128)}', space=vmem, size = 0x12000, scoped, tag = 'internal scratch']
  %s0 = inlined_call_operand.vmem [shape: f32[2,8,256], index: 0, kind: input, shape index: {}]
  %s1 = inlined_call_operand.vmem [shape: f32[2,8,256], index: 1, kind: input, shape index: {}]
  %s2 = inlined_call_operand.vmem [shape: f32[200,256], index: 2, kind: input, shape index: {}]
  %s3 = inlined_call_operand.vmem [shape: f32[72,256], index: 3, kind: input, shape index: {}]
  %s4 = inlined_call_operand.vmem [shape: bf16[8,200], index: 4, kind: input, shape index: {}]
  %s5 = inlined_call_operand.vmem [shape: f32[8,1], index: 5, kind: input, shape index: {}]
  %s6 = inlined_call_operand.vmem [shape: bf16[2,72], index: 6, kind: input, shape index: {}]
  %s7 = inlined_call_operand.vmem [shape: f32[2,1], index: 7, kind: input, shape index: {}]
  %s8 = inlined_call_operand.vmem [shape: f32[64,256], index: 8, kind: input, shape index: {}]
  %s9 = inlined_call_operand.vmem [shape: f32[32,1], index: 9, kind: input, shape index: {}]
  %s10 = inlined_call_operand.vmem [shape: f32[6,32], index: 10, kind: input, shape index: {}]
  %s11 = inlined_call_operand.vmem [shape: f32[6,1], index: 11, kind: input, shape index: {}]
  %s12 = inlined_call_operand.vmem [shape: f32[256,1], index: 12, kind: input, shape index: {}]
  %s13 = inlined_call_operand.vmem [shape: f32[1,256], index: 13, kind: input, shape index: {}]
  %s14 = inlined_call_operand.vmem [shape: f32[2,256], index: 14, kind: input, shape index: {}]
  %s15 = inlined_call_operand.vmem [shape: f32[2,8,256], index: 15, kind: output, shape index: {0}]
  %s16 = inlined_call_operand.vmem [shape: f32[2,6,1], index: 16, kind: output, shape index: {1}]
  %17 = xla_tuple %s15, %s16
  %s18 = sld [smem:[#allocation0]]
  $region101: #{stn_forward.1} parent=0
    _
  %s20 = ssub.s32 1, %s18
  %s21 = scalar_select 0, %s20, %s18
  loop: start=0, step=1, limit=4
  $region2: #{stn_forward.1} parent=0 // loop_pre_header
    _
  $region3: #{stn_forward.1} parent=0 // loop_header
    %s23 = sphi 0, %s27
    %p24 = scmp.ge.s32.totalorder %s23, 4
    %s33 = sphi 0, %s35
    %s36 = sphi 0, %s33
    %s37 = sphi 0, %s36
    %s53 = sphi 0, %s37
    %s59 = sphi 0, %s61
    %s62 = sphi 0, %s59
    %s63 = sphi 0, %s62
    %s79 = sphi 0, %s63
    %s83 = sphi 0, %s83
    %s85 = sphi 0, %s83
    %s86 = sphi 0, %s85
    %s100 = sphi 0, %s86
    %s104 = sphi 0, %s104
    %s106 = sphi 0, %s104
    %s107 = sphi 0, %s106
    %s121 = sphi 0, %s107
    %s125 = sphi 0, %s125
    %s127 = sphi 0, %s125
    %s128 = sphi 0, %s127
    %s142 = sphi 0, %s128
    %s146 = sphi 0, %s146
    %s148 = sphi 0, %s146
    %s149 = sphi 0, %s148
    %s163 = sphi 0, %s149
    %s167 = sphi 0, %s167
    %s169 = sphi 0, %s167
    %s170 = sphi 0, %s169
    %s184 = sphi 0, %s170
    %s188 = sphi 0, %s188
    %s190 = sphi 0, %s188
    %s191 = sphi 0, %s190
    %s205 = sphi 0, %s191
    %s209 = sphi 0, %s209
    %s211 = sphi 0, %s209
    %s212 = sphi 0, %s211
    %s226 = sphi 0, %s212
    %s230 = sphi 0, %s230
    %s232 = sphi 0, %s230
    %s233 = sphi 0, %s232
    %s247 = sphi 0, %s233
    %s251 = sphi 0, %s251
    %s253 = sphi 0, %s251
    %s254 = sphi 0, %s253
    %s268 = sphi 0, %s254
    %s272 = sphi 0, %s272
    %s274 = sphi 0, %s272
    %s275 = sphi 0, %s274
    %s289 = sphi 0, %s275
    %s293 = sphi 0, %s293
    %s295 = sphi 0, %s293
    %s296 = sphi 0, %s295
    %s310 = sphi 0, %s296
    %s314 = sphi 0, %s314
    %s316 = sphi 0, %s314
    %s317 = sphi 0, %s316
    %s331 = sphi 0, %s317
    %s335 = sphi 0, %s335
    %s337 = sphi 0, %s335
    %s338 = sphi 0, %s337
    %s352 = sphi 0, %s338
    %s358 = sphi 0, %s360
    %s361 = sphi 0, %s358
    %s362 = sphi 0, %s361
    %s378 = sphi 0, %s362
    %s384 = sphi 0, %s386
    %s387 = sphi 0, %s384
    %s388 = sphi 0, %s387
    %s404 = sphi 0, %s388
  $region4: #{stn_forward.1} parent=0 // loop_header_branch
    %26 = sbr.rel (%p24) target = $region8
  $region5: #{stn_forward.1} parent=0 // loop_body
    %s28 = ssub.s32 %s23, 1
    %s29 = ssub.s32 %s23, 2
    %s30 = sadd.s32 %s23, 1
    %s31 = ssub.s32 %s23, %s30
    %p32 = scmp.eq.s32.totalorder %s31, 0
    %s34 = sadd.s32 %s33, 1
    %s35 = scalar_select %p32, %s33, %s34
    %p38 = pneg %p32
    %p39 = scmp.eq.s32.totalorder %s23, 1
    %p40 = por %p38, %p39
    %p41 = scmp.ne.s32.totalorder %s33, %s36
    %p42 = scmp.eq.s32.totalorder %s23, 0
    %p43 = por %p41, %p42
    %p44 = scmp.ne.s32.totalorder %s33, %s36
    %p45 = scmp.eq.s32.totalorder %s28, 1
    %p46 = por %p44, %p45
    %p47 = scmp.ne.s32.totalorder %s36, %s37
    %p48 = scmp.eq.s32.totalorder %s28, 0
    %p49 = por %p47, %p48
    %p50 = scmp.ne.s32.totalorder %s36, %s37
    %p51 = scmp.eq.s32.totalorder %s29, 1
    %p52 = por %p50, %p51
    %p54 = scmp.ne.s32.totalorder %s37, %s53
    %p55 = scmp.eq.s32.totalorder %s29, 0
    %p56 = por %p54, %p55
    %s57 = ssub.s32 %s23, %s30
    %p58 = scmp.eq.s32.totalorder %s57, 0
    %s60 = sadd.s32 %s59, 1
    %s61 = scalar_select %p58, %s59, %s60
    %p64 = pneg %p58
    %p65 = scmp.eq.s32.totalorder %s23, 1
    %p66 = por %p64, %p65
    %p67 = scmp.ne.s32.totalorder %s59, %s62
    %p68 = scmp.eq.s32.totalorder %s23, 0
    %p69 = por %p67, %p68
    %p70 = scmp.ne.s32.totalorder %s59, %s62
    %p71 = scmp.eq.s32.totalorder %s28, 1
    %p72 = por %p70, %p71
    %p73 = scmp.ne.s32.totalorder %s62, %s63
    %p74 = scmp.eq.s32.totalorder %s28, 0
    %p75 = por %p73, %p74
    %p76 = scmp.ne.s32.totalorder %s62, %s63
    %p77 = scmp.eq.s32.totalorder %s29, 1
    %p78 = por %p76, %p77
    %p80 = scmp.ne.s32.totalorder %s63, %s79
    %p81 = scmp.eq.s32.totalorder %s29, 0
    %p82 = por %p80, %p81
    %s84 = sadd.s32 %s83, 1
    %p87 = scmp.eq.s32.totalorder %s23, 1
    %p88 = scmp.ne.s32.totalorder %s83, %s85
    %p89 = scmp.eq.s32.totalorder %s23, 0
    %p90 = por %p88, %p89
    %p91 = scmp.ne.s32.totalorder %s83, %s85
    %p92 = scmp.eq.s32.totalorder %s28, 1
    %p93 = por %p91, %p92
    %p94 = scmp.ne.s32.totalorder %s85, %s86
    %p95 = scmp.eq.s32.totalorder %s28, 0
    %p96 = por %p94, %p95
    %p97 = scmp.ne.s32.totalorder %s85, %s86
    %p98 = scmp.eq.s32.totalorder %s29, 1
    %p99 = por %p97, %p98
    %p101 = scmp.ne.s32.totalorder %s86, %s100
    %p102 = scmp.eq.s32.totalorder %s29, 0
    %p103 = por %p101, %p102
    %s105 = sadd.s32 %s104, 1
    %p108 = scmp.eq.s32.totalorder %s23, 1
    %p109 = scmp.ne.s32.totalorder %s104, %s106
    %p110 = scmp.eq.s32.totalorder %s23, 0
    %p111 = por %p109, %p110
    %p112 = scmp.ne.s32.totalorder %s104, %s106
    %p113 = scmp.eq.s32.totalorder %s28, 1
    %p114 = por %p112, %p113
    %p115 = scmp.ne.s32.totalorder %s106, %s107
    %p116 = scmp.eq.s32.totalorder %s28, 0
    %p117 = por %p115, %p116
    %p118 = scmp.ne.s32.totalorder %s106, %s107
    %p119 = scmp.eq.s32.totalorder %s29, 1
    %p120 = por %p118, %p119
    %p122 = scmp.ne.s32.totalorder %s107, %s121
    %p123 = scmp.eq.s32.totalorder %s29, 0
    %p124 = por %p122, %p123
    %s126 = sadd.s32 %s125, 1
    %p129 = scmp.eq.s32.totalorder %s23, 1
    %p130 = scmp.ne.s32.totalorder %s125, %s127
    %p131 = scmp.eq.s32.totalorder %s23, 0
    %p132 = por %p130, %p131
    %p133 = scmp.ne.s32.totalorder %s125, %s127
    %p134 = scmp.eq.s32.totalorder %s28, 1
    %p135 = por %p133, %p134
    %p136 = scmp.ne.s32.totalorder %s127, %s128
    %p137 = scmp.eq.s32.totalorder %s28, 0
    %p138 = por %p136, %p137
    %p139 = scmp.ne.s32.totalorder %s127, %s128
    %p140 = scmp.eq.s32.totalorder %s29, 1
    %p141 = por %p139, %p140
    %p143 = scmp.ne.s32.totalorder %s128, %s142
    %p144 = scmp.eq.s32.totalorder %s29, 0
    %p145 = por %p143, %p144
    %s147 = sadd.s32 %s146, 1
    %p150 = scmp.eq.s32.totalorder %s23, 1
    %p151 = scmp.ne.s32.totalorder %s146, %s148
    %p152 = scmp.eq.s32.totalorder %s23, 0
    %p153 = por %p151, %p152
    %p154 = scmp.ne.s32.totalorder %s146, %s148
    %p155 = scmp.eq.s32.totalorder %s28, 1
    %p156 = por %p154, %p155
    %p157 = scmp.ne.s32.totalorder %s148, %s149
    %p158 = scmp.eq.s32.totalorder %s28, 0
    %p159 = por %p157, %p158
    %p160 = scmp.ne.s32.totalorder %s148, %s149
    %p161 = scmp.eq.s32.totalorder %s29, 1
    %p162 = por %p160, %p161
    %p164 = scmp.ne.s32.totalorder %s149, %s163
    %p165 = scmp.eq.s32.totalorder %s29, 0
    %p166 = por %p164, %p165
    %s168 = sadd.s32 %s167, 1
    %p171 = scmp.eq.s32.totalorder %s23, 1
    %p172 = scmp.ne.s32.totalorder %s167, %s169
    %p173 = scmp.eq.s32.totalorder %s23, 0
    %p174 = por %p172, %p173
    %p175 = scmp.ne.s32.totalorder %s167, %s169
    %p176 = scmp.eq.s32.totalorder %s28, 1
    %p177 = por %p175, %p176
    %p178 = scmp.ne.s32.totalorder %s169, %s170
    %p179 = scmp.eq.s32.totalorder %s28, 0
    %p180 = por %p178, %p179
    %p181 = scmp.ne.s32.totalorder %s169, %s170
    %p182 = scmp.eq.s32.totalorder %s29, 1
    %p183 = por %p181, %p182
    %p185 = scmp.ne.s32.totalorder %s170, %s184
    %p186 = scmp.eq.s32.totalorder %s29, 0
    %p187 = por %p185, %p186
    %s189 = sadd.s32 %s188, 1
    %p192 = scmp.eq.s32.totalorder %s23, 1
    %p193 = scmp.ne.s32.totalorder %s188, %s190
    %p194 = scmp.eq.s32.totalorder %s23, 0
    %p195 = por %p193, %p194
    %p196 = scmp.ne.s32.totalorder %s188, %s190
    %p197 = scmp.eq.s32.totalorder %s28, 1
    %p198 = por %p196, %p197
    %p199 = scmp.ne.s32.totalorder %s190, %s191
    %p200 = scmp.eq.s32.totalorder %s28, 0
    %p201 = por %p199, %p200
    %p202 = scmp.ne.s32.totalorder %s190, %s191
    %p203 = scmp.eq.s32.totalorder %s29, 1
    %p204 = por %p202, %p203
    %p206 = scmp.ne.s32.totalorder %s191, %s205
    %p207 = scmp.eq.s32.totalorder %s29, 0
    %p208 = por %p206, %p207
    %s210 = sadd.s32 %s209, 1
    %p213 = scmp.eq.s32.totalorder %s23, 1
    %p214 = scmp.ne.s32.totalorder %s209, %s211
    %p215 = scmp.eq.s32.totalorder %s23, 0
    %p216 = por %p214, %p215
    %p217 = scmp.ne.s32.totalorder %s209, %s211
    %p218 = scmp.eq.s32.totalorder %s28, 1
    %p219 = por %p217, %p218
    %p220 = scmp.ne.s32.totalorder %s211, %s212
    %p221 = scmp.eq.s32.totalorder %s28, 0
    %p222 = por %p220, %p221
    %p223 = scmp.ne.s32.totalorder %s211, %s212
    %p224 = scmp.eq.s32.totalorder %s29, 1
    %p225 = por %p223, %p224
    %p227 = scmp.ne.s32.totalorder %s212, %s226
    %p228 = scmp.eq.s32.totalorder %s29, 0
    %p229 = por %p227, %p228
    %s231 = sadd.s32 %s230, 1
    %p234 = scmp.eq.s32.totalorder %s23, 1
    %p235 = scmp.ne.s32.totalorder %s230, %s232
    %p236 = scmp.eq.s32.totalorder %s23, 0
    %p237 = por %p235, %p236
    %p238 = scmp.ne.s32.totalorder %s230, %s232
    %p239 = scmp.eq.s32.totalorder %s28, 1
    %p240 = por %p238, %p239
    %p241 = scmp.ne.s32.totalorder %s232, %s233
    %p242 = scmp.eq.s32.totalorder %s28, 0
    %p243 = por %p241, %p242
    %p244 = scmp.ne.s32.totalorder %s232, %s233
    %p245 = scmp.eq.s32.totalorder %s29, 1
    %p246 = por %p244, %p245
    %p248 = scmp.ne.s32.totalorder %s233, %s247
    %p249 = scmp.eq.s32.totalorder %s29, 0
    %p250 = por %p248, %p249
    %s252 = sadd.s32 %s251, 1
    %p255 = scmp.eq.s32.totalorder %s23, 1
    %p256 = scmp.ne.s32.totalorder %s251, %s253
    %p257 = scmp.eq.s32.totalorder %s23, 0
    %p258 = por %p256, %p257
    %p259 = scmp.ne.s32.totalorder %s251, %s253
    %p260 = scmp.eq.s32.totalorder %s28, 1
    %p261 = por %p259, %p260
    %p262 = scmp.ne.s32.totalorder %s253, %s254
    %p263 = scmp.eq.s32.totalorder %s28, 0
    %p264 = por %p262, %p263
    %p265 = scmp.ne.s32.totalorder %s253, %s254
    %p266 = scmp.eq.s32.totalorder %s29, 1
    %p267 = por %p265, %p266
    %p269 = scmp.ne.s32.totalorder %s254, %s268
    %p270 = scmp.eq.s32.totalorder %s29, 0
    %p271 = por %p269, %p270
    %s273 = sadd.s32 %s272, 1
    %p276 = scmp.eq.s32.totalorder %s23, 1
    %p277 = scmp.ne.s32.totalorder %s272, %s274
    %p278 = scmp.eq.s32.totalorder %s23, 0
    %p279 = por %p277, %p278
    %p280 = scmp.ne.s32.totalorder %s272, %s274
    %p281 = scmp.eq.s32.totalorder %s28, 1
    %p282 = por %p280, %p281
    %p283 = scmp.ne.s32.totalorder %s274, %s275
    %p284 = scmp.eq.s32.totalorder %s28, 0
    %p285 = por %p283, %p284
    %p286 = scmp.ne.s32.totalorder %s274, %s275
    %p287 = scmp.eq.s32.totalorder %s29, 1
    %p288 = por %p286, %p287
    %p290 = scmp.ne.s32.totalorder %s275, %s289
    %p291 = scmp.eq.s32.totalorder %s29, 0
    %p292 = por %p290, %p291
    %s294 = sadd.s32 %s293, 1
    %p297 = scmp.eq.s32.totalorder %s23, 1
    %p298 = scmp.ne.s32.totalorder %s293, %s295
    %p299 = scmp.eq.s32.totalorder %s23, 0
    %p300 = por %p298, %p299
    %p301 = scmp.ne.s32.totalorder %s293, %s295
    %p302 = scmp.eq.s32.totalorder %s28, 1
    %p303 = por %p301, %p302
    %p304 = scmp.ne.s32.totalorder %s295, %s296
    %p305 = scmp.eq.s32.totalorder %s28, 0
    %p306 = por %p304, %p305
    %p307 = scmp.ne.s32.totalorder %s295, %s296
    %p308 = scmp.eq.s32.totalorder %s29, 1
    %p309 = por %p307, %p308
    %p311 = scmp.ne.s32.totalorder %s296, %s310
    %p312 = scmp.eq.s32.totalorder %s29, 0
    %p313 = por %p311, %p312
    %s315 = sadd.s32 %s314, 1
    %p318 = scmp.eq.s32.totalorder %s23, 1
    %p319 = scmp.ne.s32.totalorder %s314, %s316
    %p320 = scmp.eq.s32.totalorder %s23, 0
    %p321 = por %p319, %p320
    %p322 = scmp.ne.s32.totalorder %s314, %s316
    %p323 = scmp.eq.s32.totalorder %s28, 1
    %p324 = por %p322, %p323
    %p325 = scmp.ne.s32.totalorder %s316, %s317
    %p326 = scmp.eq.s32.totalorder %s28, 0
    %p327 = por %p325, %p326
    %p328 = scmp.ne.s32.totalorder %s316, %s317
    %p329 = scmp.eq.s32.totalorder %s29, 1
    %p330 = por %p328, %p329
    %p332 = scmp.ne.s32.totalorder %s317, %s331
    %p333 = scmp.eq.s32.totalorder %s29, 0
    %p334 = por %p332, %p333
    %s336 = sadd.s32 %s335, 1
    %p339 = scmp.eq.s32.totalorder %s23, 1
    %p340 = scmp.ne.s32.totalorder %s335, %s337
    %p341 = scmp.eq.s32.totalorder %s23, 0
    %p342 = por %p340, %p341
    %p343 = scmp.ne.s32.totalorder %s335, %s337
    %p344 = scmp.eq.s32.totalorder %s28, 1
    %p345 = por %p343, %p344
    %p346 = scmp.ne.s32.totalorder %s337, %s338
    %p347 = scmp.eq.s32.totalorder %s28, 0
    %p348 = por %p346, %p347
    %p349 = scmp.ne.s32.totalorder %s337, %s338
    %p350 = scmp.eq.s32.totalorder %s29, 1
    %p351 = por %p349, %p350
    %p353 = scmp.ne.s32.totalorder %s338, %s352
    %p354 = scmp.eq.s32.totalorder %s29, 0
    %p355 = por %p353, %p354
    %s356 = ssub.s32 %s23, %s30
    %p357 = scmp.eq.s32.totalorder %s356, 0
    %s359 = sadd.s32 %s358, 1
    %s360 = scalar_select %p357, %s358, %s359
    %p363 = pneg %p357
    %p364 = scmp.eq.s32.totalorder %s23, 1
    %p365 = por %p363, %p364
    %p366 = scmp.ne.s32.totalorder %s358, %s361
    %p367 = scmp.eq.s32.totalorder %s23, 0
    %p368 = por %p366, %p367
    %p369 = scmp.ne.s32.totalorder %s358, %s361
    %p370 = scmp.eq.s32.totalorder %s28, 1
    %p371 = por %p369, %p370
    %p372 = scmp.ne.s32.totalorder %s361, %s362
    %p373 = scmp.eq.s32.totalorder %s28, 0
    %p374 = por %p372, %p373
    %p375 = scmp.ne.s32.totalorder %s361, %s362
    %p376 = scmp.eq.s32.totalorder %s29, 1
    %p377 = por %p375, %p376
    %p379 = scmp.ne.s32.totalorder %s362, %s378
    %p380 = scmp.eq.s32.totalorder %s29, 0
    %p381 = por %p379, %p380
    %s382 = ssub.s32 %s23, %s30
    %p383 = scmp.eq.s32.totalorder %s382, 0
    %s385 = sadd.s32 %s384, 1
    %s386 = scalar_select %p383, %s384, %s385
    %p389 = pneg %p383
    %p390 = scmp.eq.s32.totalorder %s23, 1
    %p391 = por %p389, %p390
    %p392 = scmp.ne.s32.totalorder %s384, %s387
    %p393 = scmp.eq.s32.totalorder %s23, 0
    %p394 = por %p392, %p393
    %p395 = scmp.ne.s32.totalorder %s384, %s387
    %p396 = scmp.eq.s32.totalorder %s28, 1
    %p397 = por %p395, %p396
    %p398 = scmp.ne.s32.totalorder %s387, %s388
    %p399 = scmp.eq.s32.totalorder %s28, 0
    %p400 = por %p398, %p399
    %p401 = scmp.ne.s32.totalorder %s387, %s388
    %p402 = scmp.eq.s32.totalorder %s29, 1
    %p403 = por %p401, %p402
    %p405 = scmp.ne.s32.totalorder %s388, %s404
    %p406 = scmp.eq.s32.totalorder %s29, 0
    %p407 = por %p405, %p406
    %p408 = scmp.le.s32.totalorder 1, %s23
    %p409 = scmp.lt.s32.totalorder %s23, 3
    %p410 = pnand %p408, %p409
    %p411 = pneg %p410
    // Predicated region
    $region9: #{stn_forward.1} parent=5 // pred_check
      _
    $region10: #{stn_forward.1} parent=5 // pred_check_branch
      %413 = sbr.rel (%p410) target = $region12
    $region11: #{stn_forward.1} parent=5 // pred_region
      %s414 = ssub.s32 %s23, 1
      // Predicated region
      $region13: #{stn_forward.1} parent=11 // pred_check
        %p415 = pneg %p96
      $region14: #{stn_forward.1} parent=11 // pred_check_branch
        %417 = sbr.rel (%p415) target = $region16
      $region15: #{stn_forward.1} parent=11 // pred_region
        _
      $region16: #{stn_forward.1} parent=11 // pred_fallthru
        _
      // Predicated region
      $region17: #{stn_forward.1} parent=11 // pred_check
        %p418 = pneg %p117
      $region18: #{stn_forward.1} parent=11 // pred_check_branch
        %420 = sbr.rel (%p418) target = $region20
      $region19: #{stn_forward.1} parent=11 // pred_region
        _
      $region20: #{stn_forward.1} parent=11 // pred_fallthru
        _
      // Predicated region
      $region21: #{stn_forward.1} parent=11 // pred_check
        %p421 = pneg %p138
      $region22: #{stn_forward.1} parent=11 // pred_check_branch
        %423 = sbr.rel (%p421) target = $region24
      $region23: #{stn_forward.1} parent=11 // pred_region
        _
      $region24: #{stn_forward.1} parent=11 // pred_fallthru
        _
      // Predicated region
      $region25: #{stn_forward.1} parent=11 // pred_check
        %p424 = pneg %p159
      $region26: #{stn_forward.1} parent=11 // pred_check_branch
        %426 = sbr.rel (%p424) target = $region28
      $region27: #{stn_forward.1} parent=11 // pred_region
        _
      $region28: #{stn_forward.1} parent=11 // pred_fallthru
        _
      // Predicated region
      $region29: #{stn_forward.1} parent=11 // pred_check
        %p427 = pneg %p180
      $region30: #{stn_forward.1} parent=11 // pred_check_branch
        %429 = sbr.rel (%p427) target = $region32
      $region31: #{stn_forward.1} parent=11 // pred_region
        _
      $region32: #{stn_forward.1} parent=11 // pred_fallthru
        _
      // Predicated region
      $region33: #{stn_forward.1} parent=11 // pred_check
        %p430 = pneg %p201
      $region34: #{stn_forward.1} parent=11 // pred_check_branch
        %432 = sbr.rel (%p430) target = $region36
      $region35: #{stn_forward.1} parent=11 // pred_region
        _
      $region36: #{stn_forward.1} parent=11 // pred_fallthru
        _
      // Predicated region
      $region37: #{stn_forward.1} parent=11 // pred_check
        %p433 = pneg %p222
      $region38: #{stn_forward.1} parent=11 // pred_check_branch
        %435 = sbr.rel (%p433) target = $region40
      $region39: #{stn_forward.1} parent=11 // pred_region
        _
      $region40: #{stn_forward.1} parent=11 // pred_fallthru
        _
      // Predicated region
      $region41: #{stn_forward.1} parent=11 // pred_check
        %p436 = pneg %p243
      $region42: #{stn_forward.1} parent=11 // pred_check_branch
        %438 = sbr.rel (%p436) target = $region44
      $region43: #{stn_forward.1} parent=11 // pred_region
        _
      $region44: #{stn_forward.1} parent=11 // pred_fallthru
        _
      // Predicated region
      $region45: #{stn_forward.1} parent=11 // pred_check
        %p439 = pneg %p264
      $region46: #{stn_forward.1} parent=11 // pred_check_branch
        %441 = sbr.rel (%p439) target = $region48
      $region47: #{stn_forward.1} parent=11 // pred_region
        _
      $region48: #{stn_forward.1} parent=11 // pred_fallthru
        _
      // Predicated region
      $region49: #{stn_forward.1} parent=11 // pred_check
        %p442 = pneg %p285
      $region50: #{stn_forward.1} parent=11 // pred_check_branch
        %444 = sbr.rel (%p442) target = $region52
      $region51: #{stn_forward.1} parent=11 // pred_region
        _
      $region52: #{stn_forward.1} parent=11 // pred_fallthru
        _
      // Predicated region
      $region53: #{stn_forward.1} parent=11 // pred_check
        %p445 = pneg %p306
      $region54: #{stn_forward.1} parent=11 // pred_check_branch
        %447 = sbr.rel (%p445) target = $region56
      $region55: #{stn_forward.1} parent=11 // pred_region
        _
      $region56: #{stn_forward.1} parent=11 // pred_fallthru
        _
      // Predicated region
      $region57: #{stn_forward.1} parent=11 // pred_check
        %p448 = pneg %p327
      $region58: #{stn_forward.1} parent=11 // pred_check_branch
        %450 = sbr.rel (%p448) target = $region60
      $region59: #{stn_forward.1} parent=11 // pred_region
        _
      $region60: #{stn_forward.1} parent=11 // pred_fallthru
        _
      // Predicated region
      $region61: #{stn_forward.1} parent=11 // pred_check
        %p451 = pneg %p348
      $region62: #{stn_forward.1} parent=11 // pred_check_branch
        %453 = sbr.rel (%p451) target = $region64
      $region63: #{stn_forward.1} parent=11 // pred_region
        _
      $region64: #{stn_forward.1} parent=11 // pred_fallthru
        _
    $region12: #{stn_forward.1} parent=5 // pred_fallthru
      _
    %p454 = scmp.lt.s32.totalorder %s23, 2
    // Predicated region
    $region65: #{stn_forward.1} parent=5 // pred_check
      %p455 = pneg %p454
    $region66: #{stn_forward.1} parent=5 // pred_check_branch
      %457 = sbr.rel (%p455) target = $region68
    $region67: #{stn_forward.1} parent=5 // pred_region
      // Predicated region
      $region69: #{stn_forward.1} parent=67 // pred_check
        %p458 = pneg %p43
      $region70: #{stn_forward.1} parent=67 // pred_check_branch
        %460 = sbr.rel (%p458) target = $region72
      $region71: #{stn_forward.1} parent=67 // pred_region
        %p461 = scmp.lt.s32.totalorder %s23, 1
        %s462 = scalar_select %p461, %s23, 1
        %s463 = smul.addr %s462, 2
        %s464 = smul.addr %s463, 8
        %s465 = scalar_lea.vmem %s0, %s464
      $region72: #{stn_forward.1} parent=67 // pred_fallthru
        _
      // Predicated region
      $region73: #{stn_forward.1} parent=67 // pred_check
        %p466 = pneg %p69
      $region74: #{stn_forward.1} parent=67 // pred_check_branch
        %468 = sbr.rel (%p466) target = $region76
      $region75: #{stn_forward.1} parent=67 // pred_region
        %p469 = scmp.lt.s32.totalorder %s23, 1
        %s470 = scalar_select %p469, %s23, 1
        %s471 = smul.addr %s470, 2
        %s472 = smul.addr %s471, 8
        %s473 = scalar_lea.vmem %s1, %s472
      $region76: #{stn_forward.1} parent=67 // pred_fallthru
        _
    $region68: #{stn_forward.1} parent=5 // pred_fallthru
      _
    %p474 = scmp.le.s32.totalorder 1, %s23
    %p475 = scmp.lt.s32.totalorder %s23, 3
    %p476 = pnand %p474, %p475
    %p477 = pneg %p476
    // Predicated region
    $region77: #{stn_forward.1} parent=5 // pred_check
      _
    $region78: #{stn_forward.1} parent=5 // pred_check_branch
      %479 = sbr.rel (%p476) target = $region80
    $region79: #{stn_forward.1} parent=5 // pred_region
      %s480 = ssub.s32 %s23, 1
      %p481 = scmp.lt.s32.totalorder %s28, 1
      %s482 = scalar_select %p481, %s28, 1
      %s483 = smul.addr %s482, 2
      %s484 = smul.addr %s483, 8
      %s485 = scalar_lea.vmem %s0, %s484
      %p486 = pneg %p49
      %p487 = pneg %p46
      %p488 = scmp.lt.s32.totalorder %s28, 1
      %s489 = scalar_select %p488, %s28, 1
      %s490 = smul.addr %s489, 2
      %s491 = smul.addr %s490, 8
      %s492 = scalar_lea.vmem %s1, %s491
      %p493 = pneg %p75
      %p494 = pneg %p72
      %p495 = pneg %p96
      %p496 = pneg %p93
      %p497 = pneg %p117
      %p498 = pneg %p114
      %p499 = pneg %p138
      %p500 = pneg %p135
      %p501 = pneg %p159
      %p502 = pneg %p156
      %p503 = pneg %p180
      %p504 = pneg %p177
      %p505 = pneg %p201
      %p506 = pneg %p198
      %p507 = pneg %p222
      %p508 = pneg %p219
      %p509 = pneg %p243
      %p510 = pneg %p240
      %p511 = pneg %p264
      %p512 = pneg %p261
      %p513 = pneg %p285
      %p514 = pneg %p282
      %p515 = pneg %p306
      %p516 = pneg %p303
      %p517 = pneg %p327
      %p518 = pneg %p324
      %p519 = pneg %p348
      %p520 = pneg %p345
      %p521 = pneg %p374
      %p522 = pneg %p371
      %p523 = scmp.lt.s32.totalorder %s28, 1
      %s524 = scalar_select %p523, %s28, 1
      %s525 = smul.addr %s524, 2
      %s526 = smul.addr %s525, 8
      %s527 = scalar_lea.vmem %s15, %s526
      %p528 = pneg %p400
      %p529 = pneg %p397
      %p530 = scmp.lt.s32.totalorder %s28, 1
      %s531 = scalar_select %p530, %s28, 1
      %s532 = smul.addr %s531, 8
      %s533 = scalar_lea.vmem %s16, %s532
      %p534 = scmp.lt.s32.totalorder %s28, 1
      %s535 = scalar_select %p534, %s28, 1
      %s536 = smul.addr %s535, 2
      %s537 = smul.addr %s536, 8
      %s538 = scalar_lea.vmem %s0, %s537
      %p539 = scmp.lt.s32.totalorder %s28, 1
      %s540 = scalar_select %p539, %s28, 1
      %s541 = smul.addr %s540, 2
      %s542 = smul.addr %s541, 8
      %s543 = scalar_lea.vmem %s1, %s542
      %p544 = scmp.lt.s32.totalorder %s28, 1
      %s545 = scalar_select %p544, %s28, 1
      %s546 = smul.addr %s545, 2
      %s547 = smul.addr %s546, 8
      %s548 = scalar_lea.vmem %s15, %s547
      %p549 = scmp.lt.s32.totalorder %s28, 1
      %s550 = scalar_select %p549, %s28, 1
      %s551 = smul.addr %s550, 8
      %s552 = scalar_lea.vmem %s16, %s551
      %v554 = vld [vmem:[%s538] sm:$0xff]
      %v555 = vld [vmem:[%s538 + $0x8] sm:$0xff]
      %556 = vrot.lane.b32.xlu0 %v554, 34
      %v557 = vpop.permute.xlu0 %556
      %558 = vrot.lane.b32.xlu0 %v555, 34
      %v559 = vpop.permute.xlu0 %558
      %v560 = vlaneseq
      %v561 = vand.u32 %v560, 127
      %vm562 = vcmp.lt.s32.totalorder %v561, 34
      %v563 = vsel %vm562, %v557, %v559
      %v564 = vsel %vm562, %v559, %v557
      %565 = vrot.lane.b32.xlu0 %v554, 33
      %v566 = vpop.permute.xlu0 %565
      %567 = vrot.lane.b32.xlu0 %v555, 33
      %v568 = vpop.permute.xlu0 %567
      %vm569 = vcmp.lt.s32.totalorder %v561, 33
      %v570 = vsel %vm569, %v566, %v568
      %v571 = vsel %vm569, %v568, %v566
      %572 = vrot.lane.b32.xlu0 %v554, 32
      %v573 = vpop.permute.xlu0 %572
      %574 = vrot.lane.b32.xlu0 %v555, 32
      %v575 = vpop.permute.xlu0 %574
      %vm576 = vcmp.lt.s32.totalorder %v561, 32
      %v577 = vsel %vm576, %v573, %v575
      %v578 = vsel %vm576, %v575, %v573
      %579 = vrot.lane.b32.xlu0 %v554, 31
      %v580 = vpop.permute.xlu0 %579
      %581 = vrot.lane.b32.xlu0 %v555, 31
      %v582 = vpop.permute.xlu0 %581
      %vm583 = vcmp.lt.s32.totalorder %v561, 31
      %v584 = vsel %vm583, %v580, %v582
      %v585 = vsel %vm583, %v582, %v580
      %586 = vrot.lane.b32.xlu0 %v554, 30
      %v587 = vpop.permute.xlu0 %586
      %588 = vrot.lane.b32.xlu0 %v555, 30
      %v589 = vpop.permute.xlu0 %588
      %vm590 = vcmp.lt.s32.totalorder %v561, 30
      %v591 = vsel %vm590, %v587, %v589
      %v592 = vsel %vm590, %v589, %v587
      %593 = vrot.lane.b32.xlu0 %v554, 18
      %v594 = vpop.permute.xlu0 %593
      %595 = vrot.lane.b32.xlu0 %v555, 18
      %v596 = vpop.permute.xlu0 %595
      %vm597 = vcmp.lt.s32.totalorder %v561, 18
      %v598 = vsel %vm597, %v594, %v596
      %v599 = vsel %vm597, %v596, %v594
      %600 = vrot.lane.b32.xlu0 %v554, 17
      %v601 = vpop.permute.xlu0 %600
      %602 = vrot.lane.b32.xlu0 %v555, 17
      %v603 = vpop.permute.xlu0 %602
      %vm604 = vcmp.lt.s32.totalorder %v561, 17
      %v605 = vsel %vm604, %v601, %v603
      %v606 = vsel %vm604, %v603, %v601
      %607 = vrot.lane.b32.xlu0 %v554, 16
      %v608 = vpop.permute.xlu0 %607
      %609 = vrot.lane.b32.xlu0 %v555, 16
      %v610 = vpop.permute.xlu0 %609
      %vm611 = vcmp.lt.s32.totalorder %v561, 16
      %v612 = vsel %vm611, %v608, %v610
      %v613 = vsel %vm611, %v610, %v608
      %614 = vrot.lane.b32.xlu0 %v554, 15
      %v615 = vpop.permute.xlu0 %614
      %616 = vrot.lane.b32.xlu0 %v555, 15
      %v617 = vpop.permute.xlu0 %616
      %vm618 = vcmp.lt.s32.totalorder %v561, 15
      %v619 = vsel %vm618, %v615, %v617
      %v620 = vsel %vm618, %v617, %v615
      %621 = vrot.lane.b32.xlu0 %v554, 14
      %v622 = vpop.permute.xlu0 %621
      %623 = vrot.lane.b32.xlu0 %v555, 14
      %v624 = vpop.permute.xlu0 %623
      %vm625 = vcmp.lt.s32.totalorder %v561, 14
      %v626 = vsel %vm625, %v622, %v624
      %v627 = vsel %vm625, %v624, %v622
      %628 = vrot.lane.b32.xlu0 %v554, 2
      %v629 = vpop.permute.xlu0 %628
      %630 = vrot.lane.b32.xlu0 %v555, 2
      %v631 = vpop.permute.xlu0 %630
      %vm632 = vcmp.lt.s32.totalorder %v561, 2
      %v633 = vsel %vm632, %v629, %v631
      %v634 = vsel %vm632, %v631, %v629
      %635 = vrot.lane.b32.xlu0 %v554, 1
      %v636 = vpop.permute.xlu0 %635
      %637 = vrot.lane.b32.xlu0 %v555, 1
      %v638 = vpop.permute.xlu0 %637
      %vm639 = vcmp.lt.s32.totalorder %v561, 1
      %v640 = vsel %vm639, %v636, %v638
      %v641 = vsel %vm639, %v638, %v636
      %642 = vrot.lane.b32.xlu0 %v554, 127
      %v643 = vpop.permute.xlu0 %642
      %644 = vrot.lane.b32.xlu0 %v555, 127
      %v645 = vpop.permute.xlu0 %644
      %vm646 = vcmp.lt.s32.totalorder %v561, 127
      %v647 = vsel %vm646, %v643, %v645
      %v648 = vsel %vm646, %v645, %v643
      %649 = vrot.lane.b32.xlu0 %v554, 126
      %v650 = vpop.permute.xlu0 %649
      %651 = vrot.lane.b32.xlu0 %v555, 126
      %v652 = vpop.permute.xlu0 %651
      %vm653 = vcmp.lt.s32.totalorder %v561, 126
      %v654 = vsel %vm653, %v650, %v652
      %v655 = vsel %vm653, %v652, %v650
      %656 = vrot.lane.b32.xlu0 %v554, 114
      %v657 = vpop.permute.xlu0 %656
      %658 = vrot.lane.b32.xlu0 %v555, 114
      %v659 = vpop.permute.xlu0 %658
      %vm660 = vcmp.lt.s32.totalorder %v561, 114
      %v661 = vsel %vm660, %v657, %v659
      %v662 = vsel %vm660, %v659, %v657
      %663 = vrot.lane.b32.xlu0 %v554, 113
      %v664 = vpop.permute.xlu0 %663
      %665 = vrot.lane.b32.xlu0 %v555, 113
      %v666 = vpop.permute.xlu0 %665
      %vm667 = vcmp.lt.s32.totalorder %v561, 113
      %v668 = vsel %vm667, %v664, %v666
      %v669 = vsel %vm667, %v666, %v664
      %670 = vrot.lane.b32.xlu0 %v554, 112
      %v671 = vpop.permute.xlu0 %670
      %672 = vrot.lane.b32.xlu0 %v555, 112
      %v673 = vpop.permute.xlu0 %672
      %vm674 = vcmp.lt.s32.totalorder %v561, 112
      %v675 = vsel %vm674, %v671, %v673
      %v676 = vsel %vm674, %v673, %v671
      %677 = vrot.lane.b32.xlu0 %v554, 111
      %v678 = vpop.permute.xlu0 %677
      %679 = vrot.lane.b32.xlu0 %v555, 111
      %v680 = vpop.permute.xlu0 %679
      %vm681 = vcmp.lt.s32.totalorder %v561, 111
      %v682 = vsel %vm681, %v678, %v680
      %v683 = vsel %vm681, %v680, %v678
      %684 = vrot.lane.b32.xlu0 %v554, 110
      %v685 = vpop.permute.xlu0 %684
      %686 = vrot.lane.b32.xlu0 %v555, 110
      %v687 = vpop.permute.xlu0 %686
      %vm688 = vcmp.lt.s32.totalorder %v561, 110
      %v689 = vsel %vm688, %v685, %v687
      %v690 = vsel %vm688, %v687, %v685
      %691 = vrot.lane.b32.xlu0 %v554, 98
      %v692 = vpop.permute.xlu0 %691
      %693 = vrot.lane.b32.xlu0 %v555, 98
      %v694 = vpop.permute.xlu0 %693
      %vm695 = vcmp.lt.s32.totalorder %v561, 98
      %v696 = vsel %vm695, %v692, %v694
      %v697 = vsel %vm695, %v694, %v692
      %698 = vrot.lane.b32.xlu0 %v554, 97
      %v699 = vpop.permute.xlu0 %698
      %700 = vrot.lane.b32.xlu0 %v555, 97
      %v701 = vpop.permute.xlu0 %700
      %vm702 = vcmp.lt.s32.totalorder %v561, 97
      %v703 = vsel %vm702, %v699, %v701
      %v704 = vsel %vm702, %v701, %v699
      %705 = vrot.lane.b32.xlu0 %v554, 96
      %v706 = vpop.permute.xlu0 %705
      %707 = vrot.lane.b32.xlu0 %v555, 96
      %v708 = vpop.permute.xlu0 %707
      %vm709 = vcmp.lt.s32.totalorder %v561, 96
      %v710 = vsel %vm709, %v706, %v708
      %v711 = vsel %vm709, %v708, %v706
      %712 = vrot.lane.b32.xlu0 %v554, 95
      %v713 = vpop.permute.xlu0 %712
      %714 = vrot.lane.b32.xlu0 %v555, 95
      %v715 = vpop.permute.xlu0 %714
      %vm716 = vcmp.lt.s32.totalorder %v561, 95
      %v717 = vsel %vm716, %v713, %v715
      %v718 = vsel %vm716, %v715, %v713
      %719 = vrot.lane.b32.xlu0 %v554, 94
      %v720 = vpop.permute.xlu0 %719
      %721 = vrot.lane.b32.xlu0 %v555, 94
      %v722 = vpop.permute.xlu0 %721
      %vm723 = vcmp.lt.s32.totalorder %v561, 94
      %v724 = vsel %vm723, %v720, %v722
      %v725 = vsel %vm723, %v722, %v720
      %v726 = vld [vmem:[%s2] sm:$0xff]
      %v727 = vld [vmem:[%s2 + $0x8] sm:$0xff]
      %v728 = vld [vmem:[%s2 + $0x10] sm:$0xff]
      %v729 = vld [vmem:[%s2 + $0x18] sm:$0xff]
      %v730 = vld [vmem:[%s2 + $0x20] sm:$0xff]
      %v731 = vld [vmem:[%s2 + $0x28] sm:$0xff]
      %v732 = vld [vmem:[%s2 + $0x30] sm:$0xff]
      %v733 = vld [vmem:[%s2 + $0x38] sm:$0xff]
      %v734 = vld [vmem:[%s2 + $0x40] sm:$0xff]
      %v735 = vld [vmem:[%s2 + $0x48] sm:$0xff]
      %v736 = vld [vmem:[%s2 + $0x50] sm:$0xff]
      %v737 = vld [vmem:[%s2 + $0x58] sm:$0xff]
      %v738 = vld [vmem:[%s2 + $0x60] sm:$0xff]
      %v739 = vld [vmem:[%s2 + $0x68] sm:$0xff]
      %v740 = vld [vmem:[%s2 + $0x70] sm:$0xff]
      %v741 = vld [vmem:[%s2 + $0x78] sm:$0xff]
      %v742 = vld [vmem:[%s2 + $0x80] sm:$0xff]
      %v743 = vld [vmem:[%s2 + $0x88] sm:$0xff]
      %v744 = vld [vmem:[%s2 + $0x90] sm:$0xff]
      %v745 = vld [vmem:[%s2 + $0x98] sm:$0xff]
      %v746 = vld [vmem:[%s2 + $0xa0] sm:$0xff]
      %v747 = vld [vmem:[%s2 + $0xa8] sm:$0xff]
      %v748 = vld [vmem:[%s2 + $0xb0] sm:$0xff]
      %v749 = vld [vmem:[%s2 + $0xb8] sm:$0xff]
      %v750 = vld [vmem:[%s2 + $0xc0] sm:$0xff]
      %v751 = vld [vmem:[%s2 + $0xc8] sm:$0xff]
      %v752 = vld [vmem:[%s2 + $0xd0] sm:$0xff]
      %v753 = vld [vmem:[%s2 + $0xd8] sm:$0xff]
      %v754 = vld [vmem:[%s2 + $0xe0] sm:$0xff]
      %v755 = vld [vmem:[%s2 + $0xe8] sm:$0xff]
      %v756 = vld [vmem:[%s2 + $0xf0] sm:$0xff]
      %v757 = vld [vmem:[%s2 + $0xf8] sm:$0xff]
      %v758 = vld [vmem:[%s2 + $0x100] sm:$0xff]
      %v759 = vld [vmem:[%s2 + $0x108] sm:$0xff]
      %v760 = vld [vmem:[%s2 + $0x110] sm:$0xff]
      %v761 = vld [vmem:[%s2 + $0x118] sm:$0xff]
      %v762 = vld [vmem:[%s2 + $0x120] sm:$0xff]
      %v763 = vld [vmem:[%s2 + $0x128] sm:$0xff]
      %v764 = vld [vmem:[%s2 + $0x130] sm:$0xff]
      %v765 = vld [vmem:[%s2 + $0x138] sm:$0xff]
      %v766 = vld [vmem:[%s2 + $0x140] sm:$0xff]
      %v767 = vld [vmem:[%s2 + $0x148] sm:$0xff]
      %v768 = vld [vmem:[%s2 + $0x150] sm:$0xff]
      %v769 = vld [vmem:[%s2 + $0x158] sm:$0xff]
      %v770 = vld [vmem:[%s2 + $0x160] sm:$0xff]
      %v771 = vld [vmem:[%s2 + $0x168] sm:$0xff]
      %v772 = vld [vmem:[%s2 + $0x170] sm:$0xff]
      %v773 = vld [vmem:[%s2 + $0x178] sm:$0xff]
      %v774 = vld [vmem:[%s2 + $0x180] sm:$0xff]
      %v775 = vld [vmem:[%s2 + $0x188] sm:$0xff]
      %v776 = vmul.f32 %v564, %v726
      %v777 = vmul.f32 %v563, %v727
      %v778 = vmul.f32 %v571, %v728
      %v779 = vmul.f32 %v570, %v729
      %v780 = vmul.f32 %v578, %v730
      %v781 = vmul.f32 %v577, %v731
      %v782 = vmul.f32 %v585, %v732
      %v783 = vmul.f32 %v584, %v733
      %v784 = vmul.f32 %v592, %v734
      %v785 = vmul.f32 %v591, %v735
      %v786 = vmul.f32 %v599, %v736
      %v787 = vmul.f32 %v598, %v737
      %v788 = vmul.f32 %v606, %v738
      %v789 = vmul.f32 %v605, %v739
      %v790 = vmul.f32 %v613, %v740
      %v791 = vmul.f32 %v612, %v741
      %v792 = vmul.f32 %v620, %v742
      %v793 = vmul.f32 %v619, %v743
      %v794 = vmul.f32 %v627, %v744
      %v795 = vmul.f32 %v626, %v745
      %v796 = vmul.f32 %v634, %v746
      %v797 = vmul.f32 %v633, %v747
      %v798 = vmul.f32 %v641, %v748
      %v799 = vmul.f32 %v640, %v749
      %v800 = vmul.f32 %v554, %v750
      %v801 = vmul.f32 %v555, %v751
      %v802 = vmul.f32 %v647, %v752
      %v803 = vmul.f32 %v648, %v753
      %v804 = vmul.f32 %v654, %v754
      %v805 = vmul.f32 %v655, %v755
      %v806 = vmul.f32 %v661, %v756
      %v807 = vmul.f32 %v662, %v757
      %v808 = vmul.f32 %v668, %v758
      %v809 = vmul.f32 %v669, %v759
      %v810 = vmul.f32 %v675, %v760
      %v811 = vmul.f32 %v676, %v761
      %v812 = vmul.f32 %v682, %v762
      %v813 = vmul.f32 %v683, %v763
      %v814 = vmul.f32 %v689, %v764
      %v815 = vmul.f32 %v690, %v765
      %v816 = vmul.f32 %v696, %v766
      %v817 = vmul.f32 %v697, %v767
      %v818 = vmul.f32 %v703, %v768
      %v819 = vmul.f32 %v704, %v769
      %v820 = vmul.f32 %v710, %v770
      %v821 = vmul.f32 %v711, %v771
      %v822 = vmul.f32 %v717, %v772
      %v823 = vmul.f32 %v718, %v773
      %v824 = vmul.f32 %v724, %v774
      %v825 = vmul.f32 %v725, %v775
      %v826 = vpack.c.bf16 %v778, %v776
      %v827 = vpack.c.bf16 %v779, %v777
      %v828 = vpack.c.bf16 %v782, %v780
      %v829 = vpack.c.bf16 %v783, %v781
      %v830 = vpack.c.bf16 %v786, %v784
      %v831 = vpack.c.bf16 %v787, %v785
      %v832 = vpack.c.bf16 %v790, %v788
      %v833 = vpack.c.bf16 %v791, %v789
      %v834 = vpack.c.bf16 %v794, %v792
      %v835 = vpack.c.bf16 %v795, %v793
      %v836 = vpack.c.bf16 %v798, %v796
      %v837 = vpack.c.bf16 %v799, %v797
      %v838 = vpack.c.bf16 %v802, %v800
      %v839 = vpack.c.bf16 %v803, %v801
      %v840 = vpack.c.bf16 %v806, %v804
      %v841 = vpack.c.bf16 %v807, %v805
      %v842 = vpack.c.bf16 %v810, %v808
      %v843 = vpack.c.bf16 %v811, %v809
      %v844 = vpack.c.bf16 %v814, %v812
      %v845 = vpack.c.bf16 %v815, %v813
      %v846 = vpack.c.bf16 %v818, %v816
      %v847 = vpack.c.bf16 %v819, %v817
      %v848 = vpack.c.bf16 %v822, %v820
      %v849 = vpack.c.bf16 %v823, %v821
      %v850 = vpack.c.bf16 %v824, %v824
      %v851 = vpack.c.bf16 %v825, %v825
      %v852 = vld [vmem:[%s4] sm:$0xff]
      %v853 = vld [vmem:[%s5] sm:$0xff]
      %855 = vset.pattern.permute.xlu0 0
      %856 = vperm.xlu0 %855, %v853
      %v857 = vpop.permute.xlu0 %856
      %v860 = vunpack.c.l.b16 %v852
      %v861 = vunpack.c.h.b16 %v852
      %v862 = vpack.c.b16 %v860, %v860
      %v863 = vpack.c.b16 %v861, %v861
      %vm865 = vcmask 588800
      %v867 = vsel %vm865, %v863, 0
      %vm869 = vcmask 1043456
      %v871 = vsel %vm869, %v850, 0
      %v874 = vsel %vm869, %v851, 0
      %876 = vmatprep.subr.bf16.mxu0 %v841
      %877 = vmatpush1.bf16.msra.mxu0 %v840
      %878 = vmatprep.subr.bf16.mxu0 %v839
      %879 = vmatpush1.bf16.msra.mxu0 %v838
      %880 = vmatprep.subr.bf16.mxu0 %v837
      %881 = vmatpush1.bf16.msra.mxu0 %v836
      %882 = vmatprep.subr.bf16.mxu0 %v835
      %883 = vmatpush1.bf16.msra.mxu0 %v834
      %884 = vmatprep.subr.bf16.mxu0 %v833
      %885 = vmatpush1.bf16.msra.mxu0 %v832
      %886 = vmatprep.subr.bf16.mxu0 %v831
      %887 = vmatpush1.bf16.msra.mxu0 %v830
      %888 = vmatprep.subr.bf16.mxu0 %v829
      %889 = vmatpush1.bf16.msra.mxu0 %v828
      %890 = vmatprep.subr.bf16.mxu0 %v827
      %891 = vmatpush1.bf16.msra.mxu0 %v826
      %892 = vmatprep.subr.bf16.mxu0 0
      %893 = vmatpush2.bf16.msra.mxu0 0
      %894 = vmatprep.subr.bf16.mxu0 0
      %895 = vmatpush2.bf16.msra.mxu0 0
      %896 = vmatprep.subr.bf16.mxu0 0
      %897 = vmatpush2.bf16.msra.mxu0 0
      %898 = vmatprep.subr.bf16.mxu0 %v874
      %899 = vmatpush2.bf16.msra.mxu0 %v871
      %900 = vmatprep.subr.bf16.mxu0 %v849
      %901 = vmatpush2.bf16.msra.mxu0 %v848
      %902 = vmatprep.subr.bf16.mxu0 %v847
      %903 = vmatpush2.bf16.msra.mxu0 %v846
      %904 = vmatprep.subr.bf16.mxu0 %v845
      %905 = vmatpush2.bf16.msra.mxu0 %v844
      %906 = vmatprep.subr.bf16.mxu0 %v843
      %907 = vmatpush2.bf16.msra.mxu0 %v842
      %908 = vmatprep.mubr.bf16.mxu0 %v867
      %909 = vmatmul.mubr.bf16.gmra.mxu0 %v862
      %v910 = vpop.f32.mrf.mxu0
      %v911 = vadd.f32 %v857, %v910
      %v912 = vpop.f32.mrf.mxu0
      %v913 = vadd.f32 %v857, %v912
      %v914 = vpop.f32.mrf.mxu0
      %v915 = vpop.f32.mrf.mxu0
      %916 = vdwg.mxu0
      %v917 = vmax.f32 %v911, 0.0
      %v918 = vmax.f32 %v913, 0.0
      %919 = vrot.lane.b32.xlu0 %v917, 17
      %v920 = vpop.permute.xlu0 %919
      %921 = vrot.lane.b32.xlu0 %v918, 17
      %v922 = vpop.permute.xlu0 %921
      %v923 = vsel %vm604, %v920, %v922
      %v924 = vsel %vm604, %v922, %v920
      %925 = vrot.lane.b32.xlu0 %v917, 16
      %v926 = vpop.permute.xlu0 %925
      %927 = vrot.lane.b32.xlu0 %v918, 16
      %v928 = vpop.permute.xlu0 %927
      %v929 = vsel %vm611, %v926, %v928
      %v930 = vsel %vm611, %v928, %v926
      %931 = vrot.lane.b32.xlu0 %v917, 15
      %v932 = vpop.permute.xlu0 %931
      %933 = vrot.lane.b32.xlu0 %v918, 15
      %v934 = vpop.permute.xlu0 %933
      %v935 = vsel %vm618, %v932, %v934
      %v936 = vsel %vm618, %v934, %v932
      %937 = vrot.lane.b32.xlu0 %v917, 1
      %v938 = vpop.permute.xlu0 %937
      %939 = vrot.lane.b32.xlu0 %v918, 1
      %v940 = vpop.permute.xlu0 %939
      %v941 = vsel %vm639, %v938, %v940
      %v942 = vsel %vm639, %v940, %v938
      %943 = vrot.lane.b32.xlu0 %v917, 127
      %v944 = vpop.permute.xlu0 %943
      %945 = vrot.lane.b32.xlu0 %v918, 127
      %v946 = vpop.permute.xlu0 %945
      %v947 = vsel %vm646, %v944, %v946
      %v948 = vsel %vm646, %v946, %v944
      %949 = vrot.lane.b32.xlu0 %v917, 113
      %v950 = vpop.permute.xlu0 %949
      %951 = vrot.lane.b32.xlu0 %v918, 113
      %v952 = vpop.permute.xlu0 %951
      %v953 = vsel %vm667, %v950, %v952
      %v954 = vsel %vm667, %v952, %v950
      %955 = vrot.lane.b32.xlu0 %v917, 112
      %v956 = vpop.permute.xlu0 %955
      %957 = vrot.lane.b32.xlu0 %v918, 112
      %v958 = vpop.permute.xlu0 %957
      %v959 = vsel %vm674, %v956, %v958
      %v960 = vsel %vm674, %v958, %v956
      %961 = vrot.lane.b32.xlu0 %v917, 111
      %v962 = vpop.permute.xlu0 %961
      %963 = vrot.lane.b32.xlu0 %v918, 111
      %v964 = vpop.permute.xlu0 %963
      %v965 = vsel %vm681, %v962, %v964
      %v966 = vsel %vm681, %v964, %v962
      %v967 = vld [vmem:[%s3] sm:$0xff]
      %v968 = vld [vmem:[%s3 + $0x8] sm:$0xff]
      %v969 = vld [vmem:[%s3 + $0x10] sm:$0xff]
      %v970 = vld [vmem:[%s3 + $0x18] sm:$0xff]
      %v971 = vld [vmem:[%s3 + $0x20] sm:$0xff]
      %v972 = vld [vmem:[%s3 + $0x28] sm:$0xff]
      %v973 = vld [vmem:[%s3 + $0x30] sm:$0xff]
      %v974 = vld [vmem:[%s3 + $0x38] sm:$0xff]
      %v975 = vld [vmem:[%s3 + $0x40] sm:$0xff]
      %v976 = vld [vmem:[%s3 + $0x48] sm:$0xff]
      %v977 = vld [vmem:[%s3 + $0x50] sm:$0xff]
      %v978 = vld [vmem:[%s3 + $0x58] sm:$0xff]
      %v979 = vld [vmem:[%s3 + $0x60] sm:$0xff]
      %v980 = vld [vmem:[%s3 + $0x68] sm:$0xff]
      %v981 = vld [vmem:[%s3 + $0x70] sm:$0xff]
      %v982 = vld [vmem:[%s3 + $0x78] sm:$0xff]
      %v983 = vld [vmem:[%s3 + $0x80] sm:$0xff]
      %v984 = vld [vmem:[%s3 + $0x88] sm:$0xff]
      %v985 = vmul.f32 %v924, %v967
      %v986 = vmul.f32 %v923, %v968
      %v987 = vmul.f32 %v930, %v969
      %v988 = vmul.f32 %v929, %v970
      %v989 = vmul.f32 %v936, %v971
      %v990 = vmul.f32 %v935, %v972
      %v991 = vmul.f32 %v942, %v973
      %v992 = vmul.f32 %v941, %v974
      %v993 = vmul.f32 %v917, %v975
      %v994 = vmul.f32 %v918, %v976
      %v995 = vmul.f32 %v947, %v977
      %v996 = vmul.f32 %v948, %v978
      %v997 = vmul.f32 %v953, %v979
      %v998 = vmul.f32 %v954, %v980
      %v999 = vmul.f32 %v959, %v981
      %v1000 = vmul.f32 %v960, %v982
      %v1001 = vmul.f32 %v965, %v983
      %v1002 = vmul.f32 %v966, %v984
      %v1003 = vpack.c.bf16 %v987, %v985
      %v1004 = vpack.c.bf16 %v988, %v986
      %v1005 = vpack.c.bf16 %v991, %v989
      %v1006 = vpack.c.bf16 %v992, %v990
      %v1007 = vpack.c.bf16 %v995, %v993
      %v1008 = vpack.c.bf16 %v996, %v994
      %v1009 = vpack.c.bf16 %v999, %v997
      %v1010 = vpack.c.bf16 %v1000, %v998
      %v1011 = vpack.c.bf16 %v1001, %v1001
      %v1012 = vpack.c.bf16 %v1002, %v1002
      %v1013 = vld [vmem:[%s6] sm:$0x1]
      %v1014 = vld [vmem:[%s7] sm:$0x3]
      %1016 = vset.pattern.permute.xlu0 0
      %1017 = vperm.xlu0 %1016, %v1014
      %v1018 = vpop.permute.xlu0 %1017
      %v1021 = vsel %vm865, %v1013, 0
      %v1024 = vsel %vm869, %v1011, 0
      %v1027 = vsel %vm869, %v1012, 0
      %1029 = vmatprep.subr.bf16.mxu0 0
      %1030 = vmatpush1.bf16.msra.mxu0 0
      %1031 = vmatprep.subr.bf16.mxu0 0
      %1032 = vmatpush1.bf16.msra.mxu0 0
      %1033 = vmatprep.subr.bf16.mxu0 0
      %1034 = vmatpush1.bf16.msra.mxu0 0
      %1035 = vmatprep.subr.bf16.mxu0 %v1027
      %1036 = vmatpush1.bf16.msra.mxu0 %v1024
      %1037 = vmatprep.subr.bf16.mxu0 %v1010
      %1038 = vmatpush1.bf16.msra.mxu0 %v1009
      %1039 = vmatprep.subr.bf16.mxu0 %v1008
      %1040 = vmatpush1.bf16.msra.mxu0 %v1007
      %1041 = vmatprep.subr.bf16.mxu0 %v1006
      %1042 = vmatpush1.bf16.msra.mxu0 %v1005
      %1043 = vmatprep.subr.bf16.mxu0 %v1004
      %1044 = vmatpush1.bf16.msra.mxu0 %v1003
      %1045 = vmatprep.subr.bf16.mxu0 0
      %1046 = vmatpush2.bf16.msra.mxu0 0
      %1047 = vmatprep.subr.bf16.mxu0 0
      %1048 = vmatpush2.bf16.msra.mxu0 0
      %1049 = vmatprep.subr.bf16.mxu0 0
      %1050 = vmatpush2.bf16.msra.mxu0 0
      %1051 = vmatprep.subr.bf16.mxu0 0
      %1052 = vmatpush2.bf16.msra.mxu0 0
      %1053 = vmatprep.subr.bf16.mxu0 0
      %1054 = vmatpush2.bf16.msra.mxu0 0
      %1055 = vmatprep.subr.bf16.mxu0 0
      %1056 = vmatpush2.bf16.msra.mxu0 0
      %1057 = vmatprep.subr.bf16.mxu0 0
      %1058 = vmatpush2.bf16.msra.mxu0 0
      %1059 = vmatprep.subr.bf16.mxu0 0
      %1060 = vmatpush2.bf16.msra.mxu0 0
      %1061 = vmatprep.mubr.bf16.mxu0 0
      %1062 = vmatmul.mubr.bf16.gmra.mxu0 %v1021
      %v1063 = vpop.f32.mrf.mxu0
      %v1064 = vadd.f32 %v1018, %v1063
      %v1065 = vpop.f32.mrf.mxu0
      %v1066 = vadd.f32 %v1018, %v1065
      %v1067 = vpop.f32.mrf.mxu0
      %v1068 = vpop.f32.mrf.mxu0
      %1069 = vdwg.mxu0
      %v1070 = vmax.f32 %v1064, 0.0
      %v1071 = vmax.f32 %v1066, 0.0
      %v1072 = vld [vmem:[%s8] sm:$0xff]
      %v1073 = vld [vmem:[%s8 + $0x8] sm:$0xff]
      %v1074 = vld [vmem:[%s8 + $0x10] sm:$0xff]
      %v1075 = vld [vmem:[%s8 + $0x18] sm:$0xff]
      %v1076 = vld [vmem:[%s8 + $0x20] sm:$0xff]
      %v1077 = vld [vmem:[%s8 + $0x28] sm:$0xff]
      %v1078 = vld [vmem:[%s8 + $0x30] sm:$0xff]
      %v1079 = vld [vmem:[%s8 + $0x38] sm:$0xff]
      %v1080 = vlaneseq
      %v1081 = vshrl.u32 %v1080, 7
      %v1082 = vsub.s32 0, %v1081
      %v1083 = vrot.slane %v1070, %v1082
      %v1084 = vlaneseq
      %v1085 = vshrl.u32 %v1084, 7
      %v1086 = vsub.s32 0, %v1085
      %v1087 = vrot.slane %v1071, %v1086
      %v1088 = vmul.f32 %v1083, %v1072
      %v1089 = vmul.f32 %v1087, %v1073
      %v1090 = vmul.f32 %v1083, %v1074
      %v1091 = vmul.f32 %v1087, %v1075
      %v1092 = vmul.f32 %v1083, %v1076
      %v1093 = vmul.f32 %v1087, %v1077
      %v1094 = vmul.f32 %v1083, %v1078
      %v1095 = vmul.f32 %v1087, %v1079
      %v1096 = vld [vmem:[%s8 + $0x40] sm:$0xff]
      %v1097 = vld [vmem:[%s8 + $0x48] sm:$0xff]
      %v1098 = vld [vmem:[%s8 + $0x50] sm:$0xff]
      %v1099 = vld [vmem:[%s8 + $0x58] sm:$0xff]
      %v1100 = vld [vmem:[%s8 + $0x60] sm:$0xff]
      %v1101 = vld [vmem:[%s8 + $0x68] sm:$0xff]
      %v1102 = vld [vmem:[%s8 + $0x70] sm:$0xff]
      %v1103 = vld [vmem:[%s8 + $0x78] sm:$0xff]
      %v1104 = vlaneseq
      %v1105 = vshrl.u32 %v1104, 7
      %v1106 = vsub.s32 1, %v1105
      %v1107 = vrot.slane %v1070, %v1106
      %v1108 = vlaneseq
      %v1109 = vshrl.u32 %v1108, 7
      %v1110 = vsub.s32 1, %v1109
      %v1111 = vrot.slane %v1071, %v1110
      %v1112 = vmul.f32 %v1107, %v1096
      %v1113 = vmul.f32 %v1111, %v1097
      %v1114 = vmul.f32 %v1107, %v1098
      %v1115 = vmul.f32 %v1111, %v1099
      %v1116 = vmul.f32 %v1107, %v1100
      %v1117 = vmul.f32 %v1111, %v1101
      %v1118 = vmul.f32 %v1107, %v1102
      %v1119 = vmul.f32 %v1111, %v1103
      %v1120 = vadd.f32 %v1088, %v1112
      %v1121 = vadd.f32 %v1089, %v1113
      %v1122 = vadd.f32 %v1090, %v1114
      %v1123 = vadd.f32 %v1091, %v1115
      %v1124 = vadd.f32 %v1092, %v1116
      %v1125 = vadd.f32 %v1093, %v1117
      %v1126 = vadd.f32 %v1094, %v1118
      %v1127 = vadd.f32 %v1095, %v1119
      %v1128 = vadd.f32 %v1120, %v1121
      %1129 = vadd.xlane.f32.xlu0 %v1128
      %v1130 = vpop.xlane.xlu0 %1129
      %v1131 = vadd.f32 %v1122, %v1123
      %1132 = vadd.xlane.f32.xlu0 %v1131
      %v1133 = vpop.xlane.xlu0 %1132
      %v1134 = vadd.f32 %v1124, %v1125
      %1135 = vadd.xlane.f32.xlu0 %v1134
      %v1136 = vpop.xlane.xlu0 %1135
      %v1137 = vadd.f32 %v1126, %v1127
      %1138 = vadd.xlane.f32.xlu0 %v1137
      %v1139 = vpop.xlane.xlu0 %1138
      %v1140 = vld [vmem:[%s9] sm:$0xff]
      %v1141 = vld [vmem:[%s9 + $0x8] sm:$0xff]
      %v1142 = vld [vmem:[%s9 + $0x10] sm:$0xff]
      %v1143 = vld [vmem:[%s9 + $0x18] sm:$0xff]
      %v1144 = vadd.f32 %v1130, %v1140
      %v1145 = vadd.f32 %v1133, %v1141
      %v1146 = vadd.f32 %v1136, %v1142
      %v1147 = vadd.f32 %v1139, %v1143
      %v1148 = vmax.f32 %v1144, 0.0
      %v1149 = vmax.f32 %v1145, 0.0
      %v1150 = vmax.f32 %v1146, 0.0
      %v1151 = vmax.f32 %v1147, 0.0
      %v1152 = vld [vmem:[%s10] sm:$0x3f]
      %v1153 = vld [vmem:[%s11] sm:$0x3f]
      %vm1154 = vcmask 261120
      %v1156 = vsel %vm1154, %v1152, 0
      %1158 = vmatprep.subr.mxu0 0.0
      %1159 = vmatpush1.msra.mxu0 0.0
      %1160 = vmatprep.subr.mxu0 0.0
      %1161 = vmatpush1.msra.mxu0 0.0
      %1162 = vmatprep.subr.mxu0 0.0
      %1163 = vmatpush1.msra.mxu0 0.0
      %1164 = vmatprep.subr.mxu0 0.0
      %1165 = vmatpush1.msra.mxu0 0.0
      %1166 = vmatprep.subr.mxu0 0.0
      %1167 = vmatpush1.msra.mxu0 0.0
      %1168 = vmatprep.subr.mxu0 0.0
      %1169 = vmatpush1.msra.mxu0 0.0
      %1170 = vmatprep.subr.mxu0 0.0
      %1171 = vmatpush1.msra.mxu0 0.0
      %1172 = vmatprep.subr.mxu0 0.0
      %1173 = vmatpush1.msra.mxu0 0.0
      %1174 = vmatprep.subr.mxu0 0.0
      %1175 = vmatpush1.msra.mxu0 0.0
      %1176 = vmatprep.subr.mxu0 0.0
      %1177 = vmatpush1.msra.mxu0 0.0
      %1178 = vmatprep.subr.mxu0 0.0
      %1179 = vmatpush1.msra.mxu0 0.0
      %1180 = vmatprep.subr.mxu0 0.0
      %1181 = vmatpush1.msra.mxu0 0.0
      %1182 = vmatprep.subr.mxu0 0.0
      %1183 = vmatpush1.msra.mxu0 %v1151
      %1184 = vmatprep.subr.mxu0 0.0
      %1185 = vmatpush1.msra.mxu0 %v1150
      %1186 = vmatprep.subr.mxu0 0.0
      %1187 = vmatpush1.msra.mxu0 %v1149
      %1188 = vmatprep.subr.mxu0 0.0
      %1189 = vmatpush1.msra.mxu0 %v1148
      %1190 = vmatprep.subr.mxu0 0.0
      %1191 = vmatpush2.msra.mxu0 0.0
      %1192 = vmatprep.subr.mxu0 0.0
      %1193 = vmatpush2.msra.mxu0 0.0
      %1194 = vmatprep.subr.mxu0 0.0
      %1195 = vmatpush2.msra.mxu0 0.0
      %1196 = vmatprep.subr.mxu0 0.0
      %1197 = vmatpush2.msra.mxu0 0.0
      %1198 = vmatprep.subr.mxu0 0.0
      %1199 = vmatpush2.msra.mxu0 0.0
      %1200 = vmatprep.subr.mxu0 0.0
      %1201 = vmatpush2.msra.mxu0 0.0
      %1202 = vmatprep.subr.mxu0 0.0
      %1203 = vmatpush2.msra.mxu0 0.0
      %1204 = vmatprep.subr.mxu0 0.0
      %1205 = vmatpush2.msra.mxu0 0.0
      %1206 = vmatprep.subr.mxu0 0.0
      %1207 = vmatpush2.msra.mxu0 0.0
      %1208 = vmatprep.subr.mxu0 0.0
      %1209 = vmatpush2.msra.mxu0 0.0
      %1210 = vmatprep.subr.mxu0 0.0
      %1211 = vmatpush2.msra.mxu0 0.0
      %1212 = vmatprep.subr.mxu0 0.0
      %1213 = vmatpush2.msra.mxu0 0.0
      %1214 = vmatprep.subr.mxu0 0.0
      %1215 = vmatpush2.msra.mxu0 0.0
      %1216 = vmatprep.subr.mxu0 0.0
      %1217 = vmatpush2.msra.mxu0 0.0
      %1218 = vmatprep.subr.mxu0 0.0
      %1219 = vmatpush2.msra.mxu0 0.0
      %1220 = vmatprep.subr.mxu0 0.0
      %1221 = vmatpush2.msra.mxu0 0.0
      %1222 = vmatprep.mubr.f32.mxu0 0.0
      %1223 = vmatmul.mubr.f32.gmra.mxu0 %v1156
      %v1224 = vpop.f32.mrf.mxu0
      %v1225 = vadd.f32 %v1153, %v1224
      %v1226 = vpop.f32.mrf.mxu0
      %1227 = vdwg.mxu0
      %vm1228 = vcmask 5120
      %1229 = vst.msk [vmem:[%s552] sm:$0x3f] %vm1228, %v1225
      %v1230 = vld [vmem:[%s14] ss:$2 sm:$0x3]
      %s1231 = scalar_lea.vmem %s14, 1
      %v1232 = vld [vmem:[%s1231] ss:$2 sm:$0x3]
      %1234 = vset.pattern.permute.xlu0 0
      %1235 = vperm.xlu0 %1234, %v1225
      %v1236 = vpop.permute.xlu0 %1235
      %v1239 = vlaneseq
      %v1240 = vshrl.u32 %v1239, 7
      %v1241 = vsub.s32 0, %v1240
      %v1242 = vrot.slane %v1230, %v1241
      %v1243 = vlaneseq
      %v1244 = vshrl.u32 %v1243, 7
      %v1245 = vsub.s32 1, %v1244
      %v1246 = vrot.slane %v1230, %v1245
      %v1249 = vmul.f32 %v1236, %v1242
      %v1250 = vmul.f32 %v1236, %v1246
      %v1252 = vlaneseq
      %v1253 = vshrl.u32 %v1252, 7
      %v1254 = vsub.s32 0, %v1253
      %v1255 = vrot.slane %v1232, %v1254
      %v1256 = vlaneseq
      %v1257 = vshrl.u32 %v1256, 7
      %v1258 = vsub.s32 1, %v1257
      %v1259 = vrot.slane %v1232, %v1258
      %v1262 = vmul.f32 %v1236, %v1255
      %v1263 = vmul.f32 %v1236, %v1259
      %v1266 = vrot.slane %v1262, 1
      %v1267 = vrot.slane %v1263, 1
      %v1270 = vadd.f32 %v1249, %v1266
      %v1271 = vadd.f32 %v1250, %v1267
      %v1272 = vrot.slane %v1236, 2
      %v1274 = vadd.f32 %v1270, %v1272
      %v1275 = vadd.f32 %v1271, %v1272
      %v1276 = vadd.f32 %v1274, 1.0
      %v1277 = vadd.f32 %v1275, 1.0
      %v1278 = vmul.f32 %v1276, 8.0
      %v1279 = vmul.f32 %v1277, 8.0
      %v1280 = vsub.f32 %v1278, 0.5
      %v1281 = vsub.f32 %v1279, 0.5
      %v1282 = vfloor.f32 %v1280
      %v1283 = vfloor.f32 %v1281
      %v1284 = vsub.f32 %v1280, %v1282
      %v1285 = vsub.f32 %v1281, %v1283
      %v1286 = vcvt.f32.s32.to.zero.pseudo %v1282
      %v1287 = vcvt.f32.s32.to.zero.pseudo %v1283
      %v1288 = vadd.s32 %v1286, 1
      %v1289 = vadd.s32 %v1287, 1
      %v1290 = vsub.f32 1.0, %v1284
      %v1291 = vsub.f32 1.0, %v1285
      %v1294 = vrot.slane %v1290, 3
      %v1295 = vrot.slane %v1291, 3
      %v1298 = vmul.f32 %v1290, %v1294
      %v1299 = vmul.f32 %v1291, %v1295
      %vm1300 = vcmp.ge.s32.totalorder %v1286, 0
      %vm1301 = vcmp.ge.s32.totalorder %v1287, 0
      %vm1302 = vcmp.lt.s32.totalorder %v1286, 16
      %vm1303 = vcmp.lt.s32.totalorder %v1287, 16
      %vm1304 = vmand %vm1300, %vm1302
      %vm1305 = vmand %vm1301, %vm1303
      %v1306 = vsel %vm1300, 1, 0
      %v1307 = vsel %vm1301, 1, 0
      %v1308 = vrot.slane %v1306, 3
      %v1309 = vrot.slane %v1307, 3
      %vm1310 = vcmp.ne.s32.totalorder %v1308, 0
      %vm1311 = vcmp.ne.s32.totalorder %v1309, 0
      %vm1312 = vmand %vm1304, %vm1310
      %vm1313 = vmand %vm1305, %vm1311
      %v1314 = vsel %vm1302, 1, 0
      %v1315 = vsel %vm1303, 1, 0
      %v1316 = vrot.slane %v1314, 3
      %v1317 = vrot.slane %v1315, 3
      %vm1318 = vcmp.ne.s32.totalorder %v1316, 0
      %vm1319 = vcmp.ne.s32.totalorder %v1317, 0
      %vm1320 = vmand %vm1312, %vm1318
      %vm1321 = vmand %vm1313, %vm1319
      %v1322 = vsel %vm1320, %v1298, 0.0
      %v1323 = vsel %vm1321, %v1299, 0.0
      %v1324 = vmul.f32 %v1284, %v1294
      %v1325 = vmul.f32 %v1285, %v1295
      %vm1326 = vcmp.ge.s32.totalorder %v1288, 0
      %vm1327 = vcmp.ge.s32.totalorder %v1289, 0
      %vm1328 = vcmp.lt.s32.totalorder %v1288, 16
      %vm1329 = vcmp.lt.s32.totalorder %v1289, 16
      %vm1330 = vmand %vm1326, %vm1328
      %vm1331 = vmand %vm1327, %vm1329
      %vm1332 = vmand %vm1330, %vm1310
      %vm1333 = vmand %vm1331, %vm1311
      %vm1334 = vmand %vm1332, %vm1318
      %vm1335 = vmand %vm1333, %vm1319
      %v1336 = vsel %vm1334, %v1324, 0.0
      %v1337 = vsel %vm1335, %v1325, 0.0
      %v1340 = vrot.slane %v1284, 3
      %v1341 = vrot.slane %v1285, 3
      %v1344 = vmul.f32 %v1290, %v1340
      %v1345 = vmul.f32 %v1291, %v1341
      %v1346 = vsel %vm1326, 1, 0
      %v1347 = vsel %vm1327, 1, 0
      %v1348 = vrot.slane %v1346, 3
      %v1349 = vrot.slane %v1347, 3
      %vm1350 = vcmp.ne.s32.totalorder %v1348, 0
      %vm1351 = vcmp.ne.s32.totalorder %v1349, 0
      %vm1352 = vmand %vm1304, %vm1350
      %vm1353 = vmand %vm1305, %vm1351
      %v1354 = vsel %vm1328, 1, 0
      %v1355 = vsel %vm1329, 1, 0
      %v1356 = vrot.slane %v1354, 3
      %v1357 = vrot.slane %v1355, 3
      %vm1358 = vcmp.ne.s32.totalorder %v1356, 0
      %vm1359 = vcmp.ne.s32.totalorder %v1357, 0
      %vm1360 = vmand %vm1352, %vm1358
      %vm1361 = vmand %vm1353, %vm1359
      %v1362 = vsel %vm1360, %v1344, 0.0
      %v1363 = vsel %vm1361, %v1345, 0.0
      %v1364 = vmul.f32 %v1284, %v1340
      %v1365 = vmul.f32 %v1285, %v1341
      %vm1366 = vmand %vm1330, %vm1350
      %vm1367 = vmand %vm1331, %vm1351
      %vm1368 = vmand %vm1366, %vm1358
      %vm1369 = vmand %vm1367, %vm1359
      %v1370 = vsel %vm1368, %v1364, 0.0
      %v1371 = vsel %vm1369, %v1365, 0.0
      %v1372 = vmul.u32 %v1286, 16
      %v1373 = vmul.u32 %v1287, 16
      %v1374 = vrot.slane %v1286, 5
      %v1375 = vrot.slane %v1287, 5
      %v1376 = vadd.s32 %v1372, %v1374
      %v1377 = vadd.s32 %v1373, %v1375
      %vm1378 = vcmp.lt.s32.totalorder %v1376, 0
      %v1379 = vsub.s32 0, %v1376
      %v1380 = vsel %vm1378, %v1379, %v1376
      %v1381 = vshrl.u32 %v1380, 8
      %v1382 = vand.u32 %v1380, 255
      %v1383 = vsub.s32 0, %v1382
      %v1384 = vsel %vm1378, %v1383, %v1382
      %vm1385 = vcmp.lt.s32.totalorder %v1377, 0
      %v1386 = vsub.s32 0, %v1377
      %v1387 = vsel %vm1385, %v1386, %v1377
      %v1388 = vshrl.u32 %v1387, 8
      %v1389 = vand.u32 %v1387, 255
      %v1390 = vsub.s32 0, %v1389
      %v1391 = vsel %vm1385, %v1390, %v1389
      %vm1392 = vcmp.ne.s32.totalorder %v1384, 0
      %vm1393 = vcmp.ne.s32.totalorder %v1391, 0
      %vm1394 = vcmp.lt.s32.totalorder %v1384, 0
      %vm1395 = vcmp.lt.s32.totalorder %v1391, 0
      %vm1396 = vmand %vm1394, %vm1392
      %vm1397 = vmand %vm1395, %vm1393
      %v1398 = vadd.s32 %v1384, 256
      %v1399 = vadd.s32 %v1391, 256
      %v1400 = vsel %vm1396, %v1398, %v1384
      %v1401 = vsel %vm1397, %v1399, %v1391
      %v1402 = vlaneseq
      %v1403 = vshrl.u32 %v1402, 7
      %v1404 = vadd.s32 %v1403, 8
      %v1405 = vadd.s32 %v1403, 16
      %v1406 = vadd.s32 %v1403, 24
      %v1407 = vadd.s32 %v1403, 32
      %v1408 = vadd.s32 %v1403, 40
      %v1409 = vadd.s32 %v1403, 48
      %v1410 = vadd.s32 %v1403, 56
      %v1411 = vadd.s32 %v1403, 64
      %v1412 = vadd.s32 %v1403, 72
      %v1413 = vadd.s32 %v1403, 80
      %v1414 = vadd.s32 %v1403, 88
      %v1415 = vadd.s32 %v1403, 96
      %v1416 = vadd.s32 %v1403, 104
      %v1417 = vadd.s32 %v1403, 112
      %v1418 = vadd.s32 %v1403, 120
      %v1419 = vadd.s32 %v1403, 128
      %v1420 = vadd.s32 %v1403, 136
      %v1421 = vadd.s32 %v1403, 144
      %v1422 = vadd.s32 %v1403, 152
      %v1423 = vadd.s32 %v1403, 160
      %v1424 = vadd.s32 %v1403, 168
      %v1425 = vadd.s32 %v1403, 176
      %v1426 = vadd.s32 %v1403, 184
      %v1427 = vadd.s32 %v1403, 192
      %v1428 = vadd.s32 %v1403, 200
      %v1429 = vadd.s32 %v1403, 208
      %v1430 = vadd.s32 %v1403, 216
      %v1431 = vadd.s32 %v1403, 224
      %v1432 = vadd.s32 %v1403, 232
      %v1433 = vadd.s32 %v1403, 240
      %v1434 = vadd.s32 %v1403, 248
      %v1435 = vlaneseq
      %v1436 = vshrl.u32 %v1435, 7
      %v1437 = vsub.s32 3, %v1436
      %v1438 = vrot.slane %v1400, %v1437
      %v1439 = vlaneseq
      %v1440 = vshrl.u32 %v1439, 7
      %v1441 = vsub.s32 3, %v1440
      %v1442 = vrot.slane %v1401, %v1441
      %vm1443 = vcmp.eq.s32.totalorder %v1403, %v1438
      %vm1444 = vcmp.eq.s32.totalorder %v1403, %v1442
      %vm1445 = vcmp.eq.s32.totalorder %v1404, %v1438
      %vm1446 = vcmp.eq.s32.totalorder %v1404, %v1442
      %vm1447 = vcmp.eq.s32.totalorder %v1405, %v1438
      %vm1448 = vcmp.eq.s32.totalorder %v1405, %v1442
      %vm1449 = vcmp.eq.s32.totalorder %v1406, %v1438
      %vm1450 = vcmp.eq.s32.totalorder %v1406, %v1442
      %vm1451 = vcmp.eq.s32.totalorder %v1407, %v1438
      %vm1452 = vcmp.eq.s32.totalorder %v1407, %v1442
      %vm1453 = vcmp.eq.s32.totalorder %v1408, %v1438
      %vm1454 = vcmp.eq.s32.totalorder %v1408, %v1442
      %vm1455 = vcmp.eq.s32.totalorder %v1409, %v1438
      %vm1456 = vcmp.eq.s32.totalorder %v1409, %v1442
      %vm1457 = vcmp.eq.s32.totalorder %v1410, %v1438
      %vm1458 = vcmp.eq.s32.totalorder %v1410, %v1442
      %vm1459 = vcmp.eq.s32.totalorder %v1411, %v1438
      %vm1460 = vcmp.eq.s32.totalorder %v1411, %v1442
      %vm1461 = vcmp.eq.s32.totalorder %v1412, %v1438
      %vm1462 = vcmp.eq.s32.totalorder %v1412, %v1442
      %vm1463 = vcmp.eq.s32.totalorder %v1413, %v1438
      %vm1464 = vcmp.eq.s32.totalorder %v1413, %v1442
      %vm1465 = vcmp.eq.s32.totalorder %v1414, %v1438
      %vm1466 = vcmp.eq.s32.totalorder %v1414, %v1442
      %vm1467 = vcmp.eq.s32.totalorder %v1415, %v1438
      %vm1468 = vcmp.eq.s32.totalorder %v1415, %v1442
      %vm1469 = vcmp.eq.s32.totalorder %v1416, %v1438
      %vm1470 = vcmp.eq.s32.totalorder %v1416, %v1442
      %vm1471 = vcmp.eq.s32.totalorder %v1417, %v1438
      %vm1472 = vcmp.eq.s32.totalorder %v1417, %v1442
      %vm1473 = vcmp.eq.s32.totalorder %v1418, %v1438
      %vm1474 = vcmp.eq.s32.totalorder %v1418, %v1442
      %vm1475 = vcmp.eq.s32.totalorder %v1419, %v1438
      %vm1476 = vcmp.eq.s32.totalorder %v1419, %v1442
      %vm1477 = vcmp.eq.s32.totalorder %v1420, %v1438
      %vm1478 = vcmp.eq.s32.totalorder %v1420, %v1442
      %vm1479 = vcmp.eq.s32.totalorder %v1421, %v1438
      %vm1480 = vcmp.eq.s32.totalorder %v1421, %v1442
      %vm1481 = vcmp.eq.s32.totalorder %v1422, %v1438
      %vm1482 = vcmp.eq.s32.totalorder %v1422, %v1442
      %vm1483 = vcmp.eq.s32.totalorder %v1423, %v1438
      %vm1484 = vcmp.eq.s32.totalorder %v1423, %v1442
      %vm1485 = vcmp.eq.s32.totalorder %v1424, %v1438
      %vm1486 = vcmp.eq.s32.totalorder %v1424, %v1442
      %vm1487 = vcmp.eq.s32.totalorder %v1425, %v1438
      %vm1488 = vcmp.eq.s32.totalorder %v1425, %v1442
      %vm1489 = vcmp.eq.s32.totalorder %v1426, %v1438
      %vm1490 = vcmp.eq.s32.totalorder %v1426, %v1442
      %vm1491 = vcmp.eq.s32.totalorder %v1427, %v1438
      %vm1492 = vcmp.eq.s32.totalorder %v1427, %v1442
      %vm1493 = vcmp.eq.s32.totalorder %v1428, %v1438
      %vm1494 = vcmp.eq.s32.totalorder %v1428, %v1442
      %vm1495 = vcmp.eq.s32.totalorder %v1429, %v1438
      %vm1496 = vcmp.eq.s32.totalorder %v1429, %v1442
      %vm1497 = vcmp.eq.s32.totalorder %v1430, %v1438
      %vm1498 = vcmp.eq.s32.totalorder %v1430, %v1442
      %vm1499 = vcmp.eq.s32.totalorder %v1431, %v1438
      %vm1500 = vcmp.eq.s32.totalorder %v1431, %v1442
      %vm1501 = vcmp.eq.s32.totalorder %v1432, %v1438
      %vm1502 = vcmp.eq.s32.totalorder %v1432, %v1442
      %vm1503 = vcmp.eq.s32.totalorder %v1433, %v1438
      %vm1504 = vcmp.eq.s32.totalorder %v1433, %v1442
      %vm1505 = vcmp.eq.s32.totalorder %v1434, %v1438
      %vm1506 = vcmp.eq.s32.totalorder %v1434, %v1442
      %v1507 = vsel %vm1443, 1.0, 0.0
      %v1508 = vsel %vm1444, 1.0, 0.0
      %v1509 = vsel %vm1445, 1.0, 0.0
      %v1510 = vsel %vm1446, 1.0, 0.0
      %v1511 = vsel %vm1447, 1.0, 0.0
      %v1512 = vsel %vm1448, 1.0, 0.0
      %v1513 = vsel %vm1449, 1.0, 0.0
      %v1514 = vsel %vm1450, 1.0, 0.0
      %v1515 = vsel %vm1451, 1.0, 0.0
      %v1516 = vsel %vm1452, 1.0, 0.0
      %v1517 = vsel %vm1453, 1.0, 0.0
      %v1518 = vsel %vm1454, 1.0, 0.0
      %v1519 = vsel %vm1455, 1.0, 0.0
      %v1520 = vsel %vm1456, 1.0, 0.0
      %v1521 = vsel %vm1457, 1.0, 0.0
      %v1522 = vsel %vm1458, 1.0, 0.0
      %v1523 = vsel %vm1459, 1.0, 0.0
      %v1524 = vsel %vm1460, 1.0, 0.0
      %v1525 = vsel %vm1461, 1.0, 0.0
      %v1526 = vsel %vm1462, 1.0, 0.0
      %v1527 = vsel %vm1463, 1.0, 0.0
      %v1528 = vsel %vm1464, 1.0, 0.0
      %v1529 = vsel %vm1465, 1.0, 0.0
      %v1530 = vsel %vm1466, 1.0, 0.0
      %v1531 = vsel %vm1467, 1.0, 0.0
      %v1532 = vsel %vm1468, 1.0, 0.0
      %v1533 = vsel %vm1469, 1.0, 0.0
      %v1534 = vsel %vm1470, 1.0, 0.0
      %v1535 = vsel %vm1471, 1.0, 0.0
      %v1536 = vsel %vm1472, 1.0, 0.0
      %v1537 = vsel %vm1473, 1.0, 0.0
      %v1538 = vsel %vm1474, 1.0, 0.0
      %v1539 = vsel %vm1475, 1.0, 0.0
      %v1540 = vsel %vm1476, 1.0, 0.0
      %v1541 = vsel %vm1477, 1.0, 0.0
      %v1542 = vsel %vm1478, 1.0, 0.0
      %v1543 = vsel %vm1479, 1.0, 0.0
      %v1544 = vsel %vm1480, 1.0, 0.0
      %v1545 = vsel %vm1481, 1.0, 0.0
      %v1546 = vsel %vm1482, 1.0, 0.0
      %v1547 = vsel %vm1483, 1.0, 0.0
      %v1548 = vsel %vm1484, 1.0, 0.0
      %v1549 = vsel %vm1485, 1.0, 0.0
      %v1550 = vsel %vm1486, 1.0, 0.0
      %v1551 = vsel %vm1487, 1.0, 0.0
      %v1552 = vsel %vm1488, 1.0, 0.0
      %v1553 = vsel %vm1489, 1.0, 0.0
      %v1554 = vsel %vm1490, 1.0, 0.0
      %v1555 = vsel %vm1491, 1.0, 0.0
      %v1556 = vsel %vm1492, 1.0, 0.0
      %v1557 = vsel %vm1493, 1.0, 0.0
      %v1558 = vsel %vm1494, 1.0, 0.0
      %v1559 = vsel %vm1495, 1.0, 0.0
      %v1560 = vsel %vm1496, 1.0, 0.0
      %v1561 = vsel %vm1497, 1.0, 0.0
      %v1562 = vsel %vm1498, 1.0, 0.0
      %v1563 = vsel %vm1499, 1.0, 0.0
      %v1564 = vsel %vm1500, 1.0, 0.0
      %v1565 = vsel %vm1501, 1.0, 0.0
      %v1566 = vsel %vm1502, 1.0, 0.0
      %v1567 = vsel %vm1503, 1.0, 0.0
      %v1568 = vsel %vm1504, 1.0, 0.0
      %v1569 = vsel %vm1505, 1.0, 0.0
      %v1570 = vsel %vm1506, 1.0, 0.0
      %v1571 = vlaneseq
      %v1572 = vshrl.u32 %v1571, 7
      %v1573 = vsub.s32 0, %v1572
      %v1574 = vrot.slane %v1322, %v1573
      %v1575 = vlaneseq
      %v1576 = vshrl.u32 %v1575, 7
      %v1577 = vsub.s32 0, %v1576
      %v1578 = vrot.slane %v1323, %v1577
      %v1579 = vmul.f32 %v1507, %v1574
      %v1580 = vmul.f32 %v1508, %v1578
      %v1581 = vmul.f32 %v1509, %v1574
      %v1582 = vmul.f32 %v1510, %v1578
      %v1583 = vmul.f32 %v1511, %v1574
      %v1584 = vmul.f32 %v1512, %v1578
      %v1585 = vmul.f32 %v1513, %v1574
      %v1586 = vmul.f32 %v1514, %v1578
      %v1587 = vmul.f32 %v1515, %v1574
      %v1588 = vmul.f32 %v1516, %v1578
      %v1589 = vmul.f32 %v1517, %v1574
      %v1590 = vmul.f32 %v1518, %v1578
      %v1591 = vmul.f32 %v1519, %v1574
      %v1592 = vmul.f32 %v1520, %v1578
      %v1593 = vmul.f32 %v1521, %v1574
      %v1594 = vmul.f32 %v1522, %v1578
      %v1595 = vmul.f32 %v1523, %v1574
      %v1596 = vmul.f32 %v1524, %v1578
      %v1597 = vmul.f32 %v1525, %v1574
      %v1598 = vmul.f32 %v1526, %v1578
      %v1599 = vmul.f32 %v1527, %v1574
      %v1600 = vmul.f32 %v1528, %v1578
      %v1601 = vmul.f32 %v1529, %v1574
      %v1602 = vmul.f32 %v1530, %v1578
      %v1603 = vmul.f32 %v1531, %v1574
      %v1604 = vmul.f32 %v1532, %v1578
      %v1605 = vmul.f32 %v1533, %v1574
      %v1606 = vmul.f32 %v1534, %v1578
      %v1607 = vmul.f32 %v1535, %v1574
      %v1608 = vmul.f32 %v1536, %v1578
      %v1609 = vmul.f32 %v1537, %v1574
      %v1610 = vmul.f32 %v1538, %v1578
      %v1611 = vmul.f32 %v1539, %v1574
      %v1612 = vmul.f32 %v1540, %v1578
      %v1613 = vmul.f32 %v1541, %v1574
      %v1614 = vmul.f32 %v1542, %v1578
      %v1615 = vmul.f32 %v1543, %v1574
      %v1616 = vmul.f32 %v1544, %v1578
      %v1617 = vmul.f32 %v1545, %v1574
      %v1618 = vmul.f32 %v1546, %v1578
      %v1619 = vmul.f32 %v1547, %v1574
      %v1620 = vmul.f32 %v1548, %v1578
      %v1621 = vmul.f32 %v1549, %v1574
      %v1622 = vmul.f32 %v1550, %v1578
      %v1623 = vmul.f32 %v1551, %v1574
      %v1624 = vmul.f32 %v1552, %v1578
      %v1625 = vmul.f32 %v1553, %v1574
      %v1626 = vmul.f32 %v1554, %v1578
      %v1627 = vmul.f32 %v1555, %v1574
      %v1628 = vmul.f32 %v1556, %v1578
      %v1629 = vmul.f32 %v1557, %v1574
      %v1630 = vmul.f32 %v1558, %v1578
      %v1631 = vmul.f32 %v1559, %v1574
      %v1632 = vmul.f32 %v1560, %v1578
      %v1633 = vmul.f32 %v1561, %v1574
      %v1634 = vmul.f32 %v1562, %v1578
      %v1635 = vmul.f32 %v1563, %v1574
      %v1636 = vmul.f32 %v1564, %v1578
      %v1637 = vmul.f32 %v1565, %v1574
      %v1638 = vmul.f32 %v1566, %v1578
      %v1639 = vmul.f32 %v1567, %v1574
      %v1640 = vmul.f32 %v1568, %v1578
      %v1641 = vmul.f32 %v1569, %v1574
      %v1642 = vmul.f32 %v1570, %v1578
      %v1643 = vrot.slane %v1507, 7
      %v1644 = vrot.slane %v1508, 7
      %v1645 = vrot.slane %v1509, 7
      %v1646 = vrot.slane %v1510, 7
      %v1647 = vrot.slane %v1511, 7
      %v1648 = vrot.slane %v1512, 7
      %v1649 = vrot.slane %v1513, 7
      %v1650 = vrot.slane %v1514, 7
      %v1651 = vrot.slane %v1515, 7
      %v1652 = vrot.slane %v1516, 7
      %v1653 = vrot.slane %v1517, 7
      %v1654 = vrot.slane %v1518, 7
      %v1655 = vrot.slane %v1519, 7
      %v1656 = vrot.slane %v1520, 7
      %v1657 = vrot.slane %v1521, 7
      %v1658 = vrot.slane %v1522, 7
      %v1659 = vrot.slane %v1523, 7
      %v1660 = vrot.slane %v1524, 7
      %v1661 = vrot.slane %v1525, 7
      %v1662 = vrot.slane %v1526, 7
      %v1663 = vrot.slane %v1527, 7
      %v1664 = vrot.slane %v1528, 7
      %v1665 = vrot.slane %v1529, 7
      %v1666 = vrot.slane %v1530, 7
      %v1667 = vrot.slane %v1531, 7
      %v1668 = vrot.slane %v1532, 7
      %v1669 = vrot.slane %v1533, 7
      %v1670 = vrot.slane %v1534, 7
      %v1671 = vrot.slane %v1535, 7
      %v1672 = vrot.slane %v1536, 7
      %v1673 = vrot.slane %v1537, 7
      %v1674 = vrot.slane %v1538, 7
      %v1675 = vrot.slane %v1539, 7
      %v1676 = vrot.slane %v1540, 7
      %v1677 = vrot.slane %v1541, 7
      %v1678 = vrot.slane %v1542, 7
      %v1679 = vrot.slane %v1543, 7
      %v1680 = vrot.slane %v1544, 7
      %v1681 = vrot.slane %v1545, 7
      %v1682 = vrot.slane %v1546, 7
      %v1683 = vrot.slane %v1547, 7
      %v1684 = vrot.slane %v1548, 7
      %v1685 = vrot.slane %v1549, 7
      %v1686 = vrot.slane %v1550, 7
      %v1687 = vrot.slane %v1551, 7
      %v1688 = vrot.slane %v1552, 7
      %v1689 = vrot.slane %v1553, 7
      %v1690 = vrot.slane %v1554, 7
      %v1691 = vrot.slane %v1555, 7
      %v1692 = vrot.slane %v1556, 7
      %v1693 = vrot.slane %v1557, 7
      %v1694 = vrot.slane %v1558, 7
      %v1695 = vrot.slane %v1559, 7
      %v1696 = vrot.slane %v1560, 7
      %v1697 = vrot.slane %v1561, 7
      %v1698 = vrot.slane %v1562, 7
      %v1699 = vrot.slane %v1563, 7
      %v1700 = vrot.slane %v1564, 7
      %v1701 = vrot.slane %v1565, 7
      %v1702 = vrot.slane %v1566, 7
      %v1703 = vrot.slane %v1567, 7
      %v1704 = vrot.slane %v1568, 7
      %v1705 = vrot.slane %v1569, 7
      %v1706 = vrot.slane %v1570, 7
      %vm1707 = vcmp.lt.s32.totalorder %v1403, 1
      %v1708 = vsel %vm1707, %v1703, %v1705
      %v1709 = vsel %vm1707, %v1704, %v1706
      %v1710 = vsel %vm1707, %v1701, %v1703
      %v1711 = vsel %vm1707, %v1702, %v1704
      %v1712 = vsel %vm1707, %v1699, %v1701
      %v1713 = vsel %vm1707, %v1700, %v1702
      %v1714 = vsel %vm1707, %v1697, %v1699
      %v1715 = vsel %vm1707, %v1698, %v1700
      %v1716 = vsel %vm1707, %v1695, %v1697
      %v1717 = vsel %vm1707, %v1696, %v1698
      %v1718 = vsel %vm1707, %v1693, %v1695
      %v1719 = vsel %vm1707, %v1694, %v1696
      %v1720 = vsel %vm1707, %v1691, %v1693
      %v1721 = vsel %vm1707, %v1692, %v1694
      %v1722 = vsel %vm1707, %v1689, %v1691
      %v1723 = vsel %vm1707, %v1690, %v1692
      %v1724 = vsel %vm1707, %v1687, %v1689
      %v1725 = vsel %vm1707, %v1688, %v1690
      %v1726 = vsel %vm1707, %v1685, %v1687
      %v1727 = vsel %vm1707, %v1686, %v1688
      %v1728 = vsel %vm1707, %v1683, %v1685
      %v1729 = vsel %vm1707, %v1684, %v1686
      %v1730 = vsel %vm1707, %v1681, %v1683
      %v1731 = vsel %vm1707, %v1682, %v1684
      %v1732 = vsel %vm1707, %v1679, %v1681
      %v1733 = vsel %vm1707, %v1680, %v1682
      %v1734 = vsel %vm1707, %v1677, %v1679
      %v1735 = vsel %vm1707, %v1678, %v1680
      %v1736 = vsel %vm1707, %v1675, %v1677
      %v1737 = vsel %vm1707, %v1676, %v1678
      %v1738 = vsel %vm1707, %v1673, %v1675
      %v1739 = vsel %vm1707, %v1674, %v1676
      %v1740 = vsel %vm1707, %v1671, %v1673
      %v1741 = vsel %vm1707, %v1672, %v1674
      %v1742 = vsel %vm1707, %v1669, %v1671
      %v1743 = vsel %vm1707, %v1670, %v1672
      %v1744 = vsel %vm1707, %v1667, %v1669
      %v1745 = vsel %vm1707, %v1668, %v1670
      %v1746 = vsel %vm1707, %v1665, %v1667
      %v1747 = vsel %vm1707, %v1666, %v1668
      %v1748 = vsel %vm1707, %v1663, %v1665
      %v1749 = vsel %vm1707, %v1664, %v1666
      %v1750 = vsel %vm1707, %v1661, %v1663
      %v1751 = vsel %vm1707, %v1662, %v1664
      %v1752 = vsel %vm1707, %v1659, %v1661
      %v1753 = vsel %vm1707, %v1660, %v1662
      %v1754 = vsel %vm1707, %v1657, %v1659
      %v1755 = vsel %vm1707, %v1658, %v1660
      %v1756 = vsel %vm1707, %v1655, %v1657
      %v1757 = vsel %vm1707, %v1656, %v1658
      %v1758 = vsel %vm1707, %v1653, %v1655
      %v1759 = vsel %vm1707, %v1654, %v1656
      %v1760 = vsel %vm1707, %v1651, %v1653
      %v1761 = vsel %vm1707, %v1652, %v1654
      %v1762 = vsel %vm1707, %v1649, %v1651
      %v1763 = vsel %vm1707, %v1650, %v1652
      %v1764 = vsel %vm1707, %v1647, %v1649
      %v1765 = vsel %vm1707, %v1648, %v1650
      %v1766 = vsel %vm1707, %v1645, %v1647
      %v1767 = vsel %vm1707, %v1646, %v1648
      %v1768 = vsel %vm1707, %v1643, %v1645
      %v1769 = vsel %vm1707, %v1644, %v1646
      %v1770 = vsel %vm1707, %v1705, %v1643
      %v1771 = vsel %vm1707, %v1706, %v1644
      %v1772 = vlaneseq
      %v1773 = vshrl.u32 %v1772, 7
      %v1774 = vsub.s32 0, %v1773
      %v1775 = vrot.slane %v1336, %v1774
      %v1776 = vlaneseq
      %v1777 = vshrl.u32 %v1776, 7
      %v1778 = vsub.s32 0, %v1777
      %v1779 = vrot.slane %v1337, %v1778
      %v1780 = vmul.f32 %v1770, %v1775
      %v1781 = vmul.f32 %v1771, %v1779
      %v1782 = vmul.f32 %v1768, %v1775
      %v1783 = vmul.f32 %v1769, %v1779
      %v1784 = vmul.f32 %v1766, %v1775
      %v1785 = vmul.f32 %v1767, %v1779
      %v1786 = vmul.f32 %v1764, %v1775
      %v1787 = vmul.f32 %v1765, %v1779
      %v1788 = vmul.f32 %v1762, %v1775
      %v1789 = vmul.f32 %v1763, %v1779
      %v1790 = vmul.f32 %v1760, %v1775
      %v1791 = vmul.f32 %v1761, %v1779
      %v1792 = vmul.f32 %v1758, %v1775
      %v1793 = vmul.f32 %v1759, %v1779
      %v1794 = vmul.f32 %v1756, %v1775
      %v1795 = vmul.f32 %v1757, %v1779
      %v1796 = vmul.f32 %v1754, %v1775
      %v1797 = vmul.f32 %v1755, %v1779
      %v1798 = vmul.f32 %v1752, %v1775
      %v1799 = vmul.f32 %v1753, %v1779
      %v1800 = vmul.f32 %v1750, %v1775
      %v1801 = vmul.f32 %v1751, %v1779
      %v1802 = vmul.f32 %v1748, %v1775
      %v1803 = vmul.f32 %v1749, %v1779
      %v1804 = vmul.f32 %v1746, %v1775
      %v1805 = vmul.f32 %v1747, %v1779
      %v1806 = vmul.f32 %v1744, %v1775
      %v1807 = vmul.f32 %v1745, %v1779
      %v1808 = vmul.f32 %v1742, %v1775
      %v1809 = vmul.f32 %v1743, %v1779
      %v1810 = vmul.f32 %v1740, %v1775
      %v1811 = vmul.f32 %v1741, %v1779
      %v1812 = vmul.f32 %v1738, %v1775
      %v1813 = vmul.f32 %v1739, %v1779
      %v1814 = vmul.f32 %v1736, %v1775
      %v1815 = vmul.f32 %v1737, %v1779
      %v1816 = vmul.f32 %v1734, %v1775
      %v1817 = vmul.f32 %v1735, %v1779
      %v1818 = vmul.f32 %v1732, %v1775
      %v1819 = vmul.f32 %v1733, %v1779
      %v1820 = vmul.f32 %v1730, %v1775
      %v1821 = vmul.f32 %v1731, %v1779
      %v1822 = vmul.f32 %v1728, %v1775
      %v1823 = vmul.f32 %v1729, %v1779
      %v1824 = vmul.f32 %v1726, %v1775
      %v1825 = vmul.f32 %v1727, %v1779
      %v1826 = vmul.f32 %v1724, %v1775
      %v1827 = vmul.f32 %v1725, %v1779
      %v1828 = vmul.f32 %v1722, %v1775
      %v1829 = vmul.f32 %v1723, %v1779
      %v1830 = vmul.f32 %v1720, %v1775
      %v1831 = vmul.f32 %v1721, %v1779
      %v1832 = vmul.f32 %v1718, %v1775
      %v1833 = vmul.f32 %v1719, %v1779
      %v1834 = vmul.f32 %v1716, %v1775
      %v1835 = vmul.f32 %v1717, %v1779
      %v1836 = vmul.f32 %v1714, %v1775
      %v1837 = vmul.f32 %v1715, %v1779
      %v1838 = vmul.f32 %v1712, %v1775
      %v1839 = vmul.f32 %v1713, %v1779
      %v1840 = vmul.f32 %v1710, %v1775
      %v1841 = vmul.f32 %v1711, %v1779
      %v1842 = vmul.f32 %v1708, %v1775
      %v1843 = vmul.f32 %v1709, %v1779
      %v1844 = vadd.f32 %v1579, %v1780
      %v1845 = vadd.f32 %v1580, %v1781
      %v1846 = vadd.f32 %v1581, %v1782
      %v1847 = vadd.f32 %v1582, %v1783
      %v1848 = vadd.f32 %v1583, %v1784
      %v1849 = vadd.f32 %v1584, %v1785
      %v1850 = vadd.f32 %v1585, %v1786
      %v1851 = vadd.f32 %v1586, %v1787
      %v1852 = vadd.f32 %v1587, %v1788
      %v1853 = vadd.f32 %v1588, %v1789
      %v1854 = vadd.f32 %v1589, %v1790
      %v1855 = vadd.f32 %v1590, %v1791
      %v1856 = vadd.f32 %v1591, %v1792
      %v1857 = vadd.f32 %v1592, %v1793
      %v1858 = vadd.f32 %v1593, %v1794
      %v1859 = vadd.f32 %v1594, %v1795
      %v1860 = vadd.f32 %v1595, %v1796
      %v1861 = vadd.f32 %v1596, %v1797
      %v1862 = vadd.f32 %v1597, %v1798
      %v1863 = vadd.f32 %v1598, %v1799
      %v1864 = vadd.f32 %v1599, %v1800
      %v1865 = vadd.f32 %v1600, %v1801
      %v1866 = vadd.f32 %v1601, %v1802
      %v1867 = vadd.f32 %v1602, %v1803
      %v1868 = vadd.f32 %v1603, %v1804
      %v1869 = vadd.f32 %v1604, %v1805
      %v1870 = vadd.f32 %v1605, %v1806
      %v1871 = vadd.f32 %v1606, %v1807
      %v1872 = vadd.f32 %v1607, %v1808
      %v1873 = vadd.f32 %v1608, %v1809
      %v1874 = vadd.f32 %v1609, %v1810
      %v1875 = vadd.f32 %v1610, %v1811
      %v1876 = vadd.f32 %v1611, %v1812
      %v1877 = vadd.f32 %v1612, %v1813
      %v1878 = vadd.f32 %v1613, %v1814
      %v1879 = vadd.f32 %v1614, %v1815
      %v1880 = vadd.f32 %v1615, %v1816
      %v1881 = vadd.f32 %v1616, %v1817
      %v1882 = vadd.f32 %v1617, %v1818
      %v1883 = vadd.f32 %v1618, %v1819
      %v1884 = vadd.f32 %v1619, %v1820
      %v1885 = vadd.f32 %v1620, %v1821
      %v1886 = vadd.f32 %v1621, %v1822
      %v1887 = vadd.f32 %v1622, %v1823
      %v1888 = vadd.f32 %v1623, %v1824
      %v1889 = vadd.f32 %v1624, %v1825
      %v1890 = vadd.f32 %v1625, %v1826
      %v1891 = vadd.f32 %v1626, %v1827
      %v1892 = vadd.f32 %v1627, %v1828
      %v1893 = vadd.f32 %v1628, %v1829
      %v1894 = vadd.f32 %v1629, %v1830
      %v1895 = vadd.f32 %v1630, %v1831
      %v1896 = vadd.f32 %v1631, %v1832
      %v1897 = vadd.f32 %v1632, %v1833
      %v1898 = vadd.f32 %v1633, %v1834
      %v1899 = vadd.f32 %v1634, %v1835
      %v1900 = vadd.f32 %v1635, %v1836
      %v1901 = vadd.f32 %v1636, %v1837
      %v1902 = vadd.f32 %v1637, %v1838
      %v1903 = vadd.f32 %v1638, %v1839
      %v1904 = vadd.f32 %v1639, %v1840
      %v1905 = vadd.f32 %v1640, %v1841
      %v1906 = vadd.f32 %v1641, %v1842
      %v1907 = vadd.f32 %v1642, %v1843
      %v1908 = vlaneseq
      %v1909 = vshrl.u32 %v1908, 7
      %v1910 = vsub.s32 0, %v1909
      %v1911 = vrot.slane %v1362, %v1910
      %v1912 = vlaneseq
      %v1913 = vshrl.u32 %v1912, 7
      %v1914 = vsub.s32 0, %v1913
      %v1915 = vrot.slane %v1363, %v1914
      %v1916 = vmul.f32 %v1567, %v1911
      %v1917 = vmul.f32 %v1568, %v1915
      %v1918 = vmul.f32 %v1569, %v1911
      %v1919 = vmul.f32 %v1570, %v1915
      %v1920 = vmul.f32 %v1507, %v1911
      %v1921 = vmul.f32 %v1508, %v1915
      %v1922 = vmul.f32 %v1509, %v1911
      %v1923 = vmul.f32 %v1510, %v1915
      %v1924 = vmul.f32 %v1511, %v1911
      %v1925 = vmul.f32 %v1512, %v1915
      %v1926 = vmul.f32 %v1513, %v1911
      %v1927 = vmul.f32 %v1514, %v1915
      %v1928 = vmul.f32 %v1515, %v1911
      %v1929 = vmul.f32 %v1516, %v1915
      %v1930 = vmul.f32 %v1517, %v1911
      %v1931 = vmul.f32 %v1518, %v1915
      %v1932 = vmul.f32 %v1519, %v1911
      %v1933 = vmul.f32 %v1520, %v1915
      %v1934 = vmul.f32 %v1521, %v1911
      %v1935 = vmul.f32 %v1522, %v1915
      %v1936 = vmul.f32 %v1523, %v1911
      %v1937 = vmul.f32 %v1524, %v1915
      %v1938 = vmul.f32 %v1525, %v1911
      %v1939 = vmul.f32 %v1526, %v1915
      %v1940 = vmul.f32 %v1527, %v1911
      %v1941 = vmul.f32 %v1528, %v1915
      %v1942 = vmul.f32 %v1529, %v1911
      %v1943 = vmul.f32 %v1530, %v1915
      %v1944 = vmul.f32 %v1531, %v1911
      %v1945 = vmul.f32 %v1532, %v1915
      %v1946 = vmul.f32 %v1533, %v1911
      %v1947 = vmul.f32 %v1534, %v1915
      %v1948 = vmul.f32 %v1535, %v1911
      %v1949 = vmul.f32 %v1536, %v1915
      %v1950 = vmul.f32 %v1537, %v1911
      %v1951 = vmul.f32 %v1538, %v1915
      %v1952 = vmul.f32 %v1539, %v1911
      %v1953 = vmul.f32 %v1540, %v1915
      %v1954 = vmul.f32 %v1541, %v1911
      %v1955 = vmul.f32 %v1542, %v1915
      %v1956 = vmul.f32 %v1543, %v1911
      %v1957 = vmul.f32 %v1544, %v1915
      %v1958 = vmul.f32 %v1545, %v1911
      %v1959 = vmul.f32 %v1546, %v1915
      %v1960 = vmul.f32 %v1547, %v1911
      %v1961 = vmul.f32 %v1548, %v1915
      %v1962 = vmul.f32 %v1549, %v1911
      %v1963 = vmul.f32 %v1550, %v1915
      %v1964 = vmul.f32 %v1551, %v1911
      %v1965 = vmul.f32 %v1552, %v1915
      %v1966 = vmul.f32 %v1553, %v1911
      %v1967 = vmul.f32 %v1554, %v1915
      %v1968 = vmul.f32 %v1555, %v1911
      %v1969 = vmul.f32 %v1556, %v1915
      %v1970 = vmul.f32 %v1557, %v1911
      %v1971 = vmul.f32 %v1558, %v1915
      %v1972 = vmul.f32 %v1559, %v1911
      %v1973 = vmul.f32 %v1560, %v1915
      %v1974 = vmul.f32 %v1561, %v1911
      %v1975 = vmul.f32 %v1562, %v1915
      %v1976 = vmul.f32 %v1563, %v1911
      %v1977 = vmul.f32 %v1564, %v1915
      %v1978 = vmul.f32 %v1565, %v1911
      %v1979 = vmul.f32 %v1566, %v1915
      %v1980 = vadd.f32 %v1844, %v1916
      %v1981 = vadd.f32 %v1845, %v1917
      %v1982 = vadd.f32 %v1846, %v1918
      %v1983 = vadd.f32 %v1847, %v1919
      %v1984 = vadd.f32 %v1848, %v1920
      %v1985 = vadd.f32 %v1849, %v1921
      %v1986 = vadd.f32 %v1850, %v1922
      %v1987 = vadd.f32 %v1851, %v1923
      %v1988 = vadd.f32 %v1852, %v1924
      %v1989 = vadd.f32 %v1853, %v1925
      %v1990 = vadd.f32 %v1854, %v1926
      %v1991 = vadd.f32 %v1855, %v1927
      %v1992 = vadd.f32 %v1856, %v1928
      %v1993 = vadd.f32 %v1857, %v1929
      %v1994 = vadd.f32 %v1858, %v1930
      %v1995 = vadd.f32 %v1859, %v1931
      %v1996 = vadd.f32 %v1860, %v1932
      %v1997 = vadd.f32 %v1861, %v1933
      %v1998 = vadd.f32 %v1862, %v1934
      %v1999 = vadd.f32 %v1863, %v1935
      %v2000 = vadd.f32 %v1864, %v1936
      %v2001 = vadd.f32 %v1865, %v1937
      %v2002 = vadd.f32 %v1866, %v1938
      %v2003 = vadd.f32 %v1867, %v1939
      %v2004 = vadd.f32 %v1868, %v1940
      %v2005 = vadd.f32 %v1869, %v1941
      %v2006 = vadd.f32 %v1870, %v1942
      %v2007 = vadd.f32 %v1871, %v1943
      %v2008 = vadd.f32 %v1872, %v1944
      %v2009 = vadd.f32 %v1873, %v1945
      %v2010 = vadd.f32 %v1874, %v1946
      %v2011 = vadd.f32 %v1875, %v1947
      %v2012 = vadd.f32 %v1876, %v1948
      %v2013 = vadd.f32 %v1877, %v1949
      %v2014 = vadd.f32 %v1878, %v1950
      %v2015 = vadd.f32 %v1879, %v1951
      %v2016 = vadd.f32 %v1880, %v1952
      %v2017 = vadd.f32 %v1881, %v1953
      %v2018 = vadd.f32 %v1882, %v1954
      %v2019 = vadd.f32 %v1883, %v1955
      %v2020 = vadd.f32 %v1884, %v1956
      %v2021 = vadd.f32 %v1885, %v1957
      %v2022 = vadd.f32 %v1886, %v1958
      %v2023 = vadd.f32 %v1887, %v1959
      %v2024 = vadd.f32 %v1888, %v1960
      %v2025 = vadd.f32 %v1889, %v1961
      %v2026 = vadd.f32 %v1890, %v1962
      %v2027 = vadd.f32 %v1891, %v1963
      %v2028 = vadd.f32 %v1892, %v1964
      %v2029 = vadd.f32 %v1893, %v1965
      %v2030 = vadd.f32 %v1894, %v1966
      %v2031 = vadd.f32 %v1895, %v1967
      %v2032 = vadd.f32 %v1896, %v1968
      %v2033 = vadd.f32 %v1897, %v1969
      %v2034 = vadd.f32 %v1898, %v1970
      %v2035 = vadd.f32 %v1899, %v1971
      %v2036 = vadd.f32 %v1900, %v1972
      %v2037 = vadd.f32 %v1901, %v1973
      %v2038 = vadd.f32 %v1902, %v1974
      %v2039 = vadd.f32 %v1903, %v1975
      %v2040 = vadd.f32 %v1904, %v1976
      %v2041 = vadd.f32 %v1905, %v1977
      %v2042 = vadd.f32 %v1906, %v1978
      %v2043 = vadd.f32 %v1907, %v1979
      %v2044 = vlaneseq
      %v2045 = vshrl.u32 %v2044, 7
      %v2046 = vsub.s32 0, %v2045
      %v2047 = vrot.slane %v1370, %v2046
      %v2048 = vlaneseq
      %v2049 = vshrl.u32 %v2048, 7
      %v2050 = vsub.s32 0, %v2049
      %v2051 = vrot.slane %v1371, %v2050
      %v2052 = vmul.f32 %v1710, %v2047
      %v2053 = vmul.f32 %v1711, %v2051
      %v2054 = vmul.f32 %v1708, %v2047
      %v2055 = vmul.f32 %v1709, %v2051
      %v2056 = vmul.f32 %v1770, %v2047
      %v2057 = vmul.f32 %v1771, %v2051
      %v2058 = vmul.f32 %v1768, %v2047
      %v2059 = vmul.f32 %v1769, %v2051
      %v2060 = vmul.f32 %v1766, %v2047
      %v2061 = vmul.f32 %v1767, %v2051
      %v2062 = vmul.f32 %v1764, %v2047
      %v2063 = vmul.f32 %v1765, %v2051
      %v2064 = vmul.f32 %v1762, %v2047
      %v2065 = vmul.f32 %v1763, %v2051
      %v2066 = vmul.f32 %v1760, %v2047
      %v2067 = vmul.f32 %v1761, %v2051
      %v2068 = vmul.f32 %v1758, %v2047
      %v2069 = vmul.f32 %v1759, %v2051
      %v2070 = vmul.f32 %v1756, %v2047
      %v2071 = vmul.f32 %v1757, %v2051
      %v2072 = vmul.f32 %v1754, %v2047
      %v2073 = vmul.f32 %v1755, %v2051
      %v2074 = vmul.f32 %v1752, %v2047
      %v2075 = vmul.f32 %v1753, %v2051
      %v2076 = vmul.f32 %v1750, %v2047
      %v2077 = vmul.f32 %v1751, %v2051
      %v2078 = vmul.f32 %v1748, %v2047
      %v2079 = vmul.f32 %v1749, %v2051
      %v2080 = vmul.f32 %v1746, %v2047
      %v2081 = vmul.f32 %v1747, %v2051
      %v2082 = vmul.f32 %v1744, %v2047
      %v2083 = vmul.f32 %v1745, %v2051
      %v2084 = vmul.f32 %v1742, %v2047
      %v2085 = vmul.f32 %v1743, %v2051
      %v2086 = vmul.f32 %v1740, %v2047
      %v2087 = vmul.f32 %v1741, %v2051
      %v2088 = vmul.f32 %v1738, %v2047
      %v2089 = vmul.f32 %v1739, %v2051
      %v2090 = vmul.f32 %v1736, %v2047
      %v2091 = vmul.f32 %v1737, %v2051
      %v2092 = vmul.f32 %v1734, %v2047
      %v2093 = vmul.f32 %v1735, %v2051
      %v2094 = vmul.f32 %v1732, %v2047
      %v2095 = vmul.f32 %v1733, %v2051
      %v2096 = vmul.f32 %v1730, %v2047
      %v2097 = vmul.f32 %v1731, %v2051
      %v2098 = vmul.f32 %v1728, %v2047
      %v2099 = vmul.f32 %v1729, %v2051
      %v2100 = vmul.f32 %v1726, %v2047
      %v2101 = vmul.f32 %v1727, %v2051
      %v2102 = vmul.f32 %v1724, %v2047
      %v2103 = vmul.f32 %v1725, %v2051
      %v2104 = vmul.f32 %v1722, %v2047
      %v2105 = vmul.f32 %v1723, %v2051
      %v2106 = vmul.f32 %v1720, %v2047
      %v2107 = vmul.f32 %v1721, %v2051
      %v2108 = vmul.f32 %v1718, %v2047
      %v2109 = vmul.f32 %v1719, %v2051
      %v2110 = vmul.f32 %v1716, %v2047
      %v2111 = vmul.f32 %v1717, %v2051
      %v2112 = vmul.f32 %v1714, %v2047
      %v2113 = vmul.f32 %v1715, %v2051
      %v2114 = vmul.f32 %v1712, %v2047
      %v2115 = vmul.f32 %v1713, %v2051
      %v2116 = vadd.f32 %v1980, %v2052
      %v2117 = vadd.f32 %v1981, %v2053
      %v2118 = vadd.f32 %v1982, %v2054
      %v2119 = vadd.f32 %v1983, %v2055
      %v2120 = vadd.f32 %v1984, %v2056
      %v2121 = vadd.f32 %v1985, %v2057
      %v2122 = vadd.f32 %v1986, %v2058
      %v2123 = vadd.f32 %v1987, %v2059
      %v2124 = vadd.f32 %v1988, %v2060
      %v2125 = vadd.f32 %v1989, %v2061
      %v2126 = vadd.f32 %v1990, %v2062
      %v2127 = vadd.f32 %v1991, %v2063
      %v2128 = vadd.f32 %v1992, %v2064
      %v2129 = vadd.f32 %v1993, %v2065
      %v2130 = vadd.f32 %v1994, %v2066
      %v2131 = vadd.f32 %v1995, %v2067
      %v2132 = vadd.f32 %v1996, %v2068
      %v2133 = vadd.f32 %v1997, %v2069
      %v2134 = vadd.f32 %v1998, %v2070
      %v2135 = vadd.f32 %v1999, %v2071
      %v2136 = vadd.f32 %v2000, %v2072
      %v2137 = vadd.f32 %v2001, %v2073
      %v2138 = vadd.f32 %v2002, %v2074
      %v2139 = vadd.f32 %v2003, %v2075
      %v2140 = vadd.f32 %v2004, %v2076
      %v2141 = vadd.f32 %v2005, %v2077
      %v2142 = vadd.f32 %v2006, %v2078
      %v2143 = vadd.f32 %v2007, %v2079
      %v2144 = vadd.f32 %v2008, %v2080
      %v2145 = vadd.f32 %v2009, %v2081
      %v2146 = vadd.f32 %v2010, %v2082
      %v2147 = vadd.f32 %v2011, %v2083
      %v2148 = vadd.f32 %v2012, %v2084
      %v2149 = vadd.f32 %v2013, %v2085
      %v2150 = vadd.f32 %v2014, %v2086
      %v2151 = vadd.f32 %v2015, %v2087
      %v2152 = vadd.f32 %v2016, %v2088
      %v2153 = vadd.f32 %v2017, %v2089
      %v2154 = vadd.f32 %v2018, %v2090
      %v2155 = vadd.f32 %v2019, %v2091
      %v2156 = vadd.f32 %v2020, %v2092
      %v2157 = vadd.f32 %v2021, %v2093
      %v2158 = vadd.f32 %v2022, %v2094
      %v2159 = vadd.f32 %v2023, %v2095
      %v2160 = vadd.f32 %v2024, %v2096
      %v2161 = vadd.f32 %v2025, %v2097
      %v2162 = vadd.f32 %v2026, %v2098
      %v2163 = vadd.f32 %v2027, %v2099
      %v2164 = vadd.f32 %v2028, %v2100
      %v2165 = vadd.f32 %v2029, %v2101
      %v2166 = vadd.f32 %v2030, %v2102
      %v2167 = vadd.f32 %v2031, %v2103
      %v2168 = vadd.f32 %v2032, %v2104
      %v2169 = vadd.f32 %v2033, %v2105
      %v2170 = vadd.f32 %v2034, %v2106
      %v2171 = vadd.f32 %v2035, %v2107
      %v2172 = vadd.f32 %v2036, %v2108
      %v2173 = vadd.f32 %v2037, %v2109
      %v2174 = vadd.f32 %v2038, %v2110
      %v2175 = vadd.f32 %v2039, %v2111
      %v2176 = vadd.f32 %v2040, %v2112
      %v2177 = vadd.f32 %v2041, %v2113
      %v2178 = vadd.f32 %v2042, %v2114
      %v2179 = vadd.f32 %v2043, %v2115
      %v2180 = vld [vmem:[%s543] sm:$0xff]
      %v2181 = vld [vmem:[%s543 + $0x8] sm:$0xff]
      %2182 = vmatprep.subr.mxu0 %v2147
      %2183 = vmatpush1.msra.mxu0 %v2146
      %2184 = vmatprep.subr.mxu0 %v2145
      %2185 = vmatpush1.msra.mxu0 %v2144
      %2186 = vmatprep.subr.mxu0 %v2143
      %2187 = vmatpush1.msra.mxu0 %v2142
      %2188 = vmatprep.subr.mxu0 %v2141
      %2189 = vmatpush1.msra.mxu0 %v2140
      %2190 = vmatprep.subr.mxu0 %v2139
      %2191 = vmatpush1.msra.mxu0 %v2138
      %2192 = vmatprep.subr.mxu0 %v2137
      %2193 = vmatpush1.msra.mxu0 %v2136
      %2194 = vmatprep.subr.mxu0 %v2135
      %2195 = vmatpush1.msra.mxu0 %v2134
      %2196 = vmatprep.subr.mxu0 %v2133
      %2197 = vmatpush1.msra.mxu0 %v2132
      %2198 = vmatprep.subr.mxu0 %v2131
      %2199 = vmatpush1.msra.mxu0 %v2130
      %2200 = vmatprep.subr.mxu0 %v2129
      %2201 = vmatpush1.msra.mxu0 %v2128
      %2202 = vmatprep.subr.mxu0 %v2127
      %2203 = vmatpush1.msra.mxu0 %v2126
      %2204 = vmatprep.subr.mxu0 %v2125
      %2205 = vmatpush1.msra.mxu0 %v2124
      %2206 = vmatprep.subr.mxu0 %v2123
      %2207 = vmatpush1.msra.mxu0 %v2122
      %2208 = vmatprep.subr.mxu0 %v2121
      %2209 = vmatpush1.msra.mxu0 %v2120
      %2210 = vmatprep.subr.mxu0 %v2119
      %2211 = vmatpush1.msra.mxu0 %v2118
      %2212 = vmatprep.subr.mxu0 %v2117
      %2213 = vmatpush1.msra.mxu0 %v2116
      %2214 = vmatprep.subr.mxu0 %v2179
      %2215 = vmatpush2.msra.mxu0 %v2178
      %2216 = vmatprep.subr.mxu0 %v2177
      %2217 = vmatpush2.msra.mxu0 %v2176
      %2218 = vmatprep.subr.mxu0 %v2175
      %2219 = vmatpush2.msra.mxu0 %v2174
      %2220 = vmatprep.subr.mxu0 %v2173
      %2221 = vmatpush2.msra.mxu0 %v2172
      %2222 = vmatprep.subr.mxu0 %v2171
      %2223 = vmatpush2.msra.mxu0 %v2170
      %2224 = vmatprep.subr.mxu0 %v2169
      %2225 = vmatpush2.msra.mxu0 %v2168
      %2226 = vmatprep.subr.mxu0 %v2167
      %2227 = vmatpush2.msra.mxu0 %v2166
      %2228 = vmatprep.subr.mxu0 %v2165
      %2229 = vmatpush2.msra.mxu0 %v2164
      %2230 = vmatprep.subr.mxu0 %v2163
      %2231 = vmatpush2.msra.mxu0 %v2162
      %2232 = vmatprep.subr.mxu0 %v2161
      %2233 = vmatpush2.msra.mxu0 %v2160
      %2234 = vmatprep.subr.mxu0 %v2159
      %2235 = vmatpush2.msra.mxu0 %v2158
      %2236 = vmatprep.subr.mxu0 %v2157
      %2237 = vmatpush2.msra.mxu0 %v2156
      %2238 = vmatprep.subr.mxu0 %v2155
      %2239 = vmatpush2.msra.mxu0 %v2154
      %2240 = vmatprep.subr.mxu0 %v2153
      %2241 = vmatpush2.msra.mxu0 %v2152
      %2242 = vmatprep.subr.mxu0 %v2151
      %2243 = vmatpush2.msra.mxu0 %v2150
      %2244 = vmatprep.subr.mxu0 %v2149
      %2245 = vmatpush2.msra.mxu0 %v2148
      %2246 = vmatprep.mubr.f32.mxu0 %v2181
      %2247 = vmatmul.mubr.f32.gmra.mxu0 %v2180
      %v2248 = vpop.f32.mrf.mxu0
      %v2249 = vadd.f32 0.0, %v2248
      %v2250 = vpop.f32.mrf.mxu0
      %v2251 = vadd.f32 0.0, %v2250
      %2252 = vdwg.mxu0
      %2253 = vst [vmem:[%s548] sm:$0xff] %v2249
      %2254 = vst [vmem:[%s548 + $0x8] sm:$0xff] %v2251
      %p2255 = scmp.lt.s32.totalorder %s28, 1
      %s2256 = scalar_select %p2255, %s28, 1
      %s2257 = smul.addr %s2256, 2
      %s2258 = smul.addr %s2257, 8
      %s2259 = scalar_lea.vmem %s15, %s2258
      %p2260 = scmp.lt.s32.totalorder %s28, 1
      %s2261 = scalar_select %p2260, %s28, 1
      %s2262 = smul.addr %s2261, 8
      %s2263 = scalar_lea.vmem %s16, %s2262
      // Predicated region
      $region81: #{stn_forward.1} parent=79 // pred_check
        %p2264 = pneg %p371
      $region82: #{stn_forward.1} parent=79 // pred_check_branch
        %2266 = sbr.rel (%p2264) target = $region84
      $region83: #{stn_forward.1} parent=79 // pred_region
        _
      $region84: #{stn_forward.1} parent=79 // pred_fallthru
        _
      // Predicated region
      $region85: #{stn_forward.1} parent=79 // pred_check
        %p2267 = pneg %p397
      $region86: #{stn_forward.1} parent=79 // pred_check_branch
        %2269 = sbr.rel (%p2267) target = $region88
      $region87: #{stn_forward.1} parent=79 // pred_region
        _
      $region88: #{stn_forward.1} parent=79 // pred_fallthru
        _
    $region80: #{stn_forward.1} parent=5 // pred_fallthru
      _
    %p2270 = scmp.le.s32.totalorder 2, %s23
    // Predicated region
    $region89: #{stn_forward.1} parent=5 // pred_check
      %p2271 = pneg %p2270
    $region90: #{stn_forward.1} parent=5 // pred_check_branch
      %2273 = sbr.rel (%p2271) target = $region92
    $region91: #{stn_forward.1} parent=5 // pred_region
      %s2274 = ssub.s32 %s23, 2
      // Predicated region
      $region93: #{stn_forward.1} parent=91 // pred_check
        %p2275 = pneg %p377
      $region94: #{stn_forward.1} parent=91 // pred_check_branch
        %2277 = sbr.rel (%p2275) target = $region96
      $region95: #{stn_forward.1} parent=91 // pred_region
        %p2278 = scmp.lt.s32.totalorder %s29, 1
        %s2279 = scalar_select %p2278, %s29, 1
        %s2280 = smul.addr %s2279, 2
        %s2281 = smul.addr %s2280, 8
        %s2282 = scalar_lea.vmem %s15, %s2281
      $region96: #{stn_forward.1} parent=91 // pred_fallthru
        _
      // Predicated region
      $region97: #{stn_forward.1} parent=91 // pred_check
        %p2283 = pneg %p403
      $region98: #{stn_forward.1} parent=91 // pred_check_branch
        %2285 = sbr.rel (%p2283) target = $region100
      $region99: #{stn_forward.1} parent=91 // pred_region
        %p2286 = scmp.lt.s32.totalorder %s29, 1
        %s2287 = scalar_select %p2286, %s29, 1
        %s2288 = smul.addr %s2287, 8
        %s2289 = scalar_lea.vmem %s16, %s2288
      $region100: #{stn_forward.1} parent=91 // pred_fallthru
        _
    $region92: #{stn_forward.1} parent=5 // pred_fallthru
      _
  $region6: #{stn_forward.1} parent=0 // loop_footer
    %s27 = sadd.s32 1, %s23
  $region7: #{stn_forward.1} parent=0 // loop_footer_branch
    %22 = sbr.rel target = $region3
  $region8: #{stn_forward.1} parent=0 // loop_exit
    _

</llo_original>
